<compile_context>
chip_gen: v7x
topology: tpu7x:2x2x1
jax: 0.10.0
libtpu: 0.0.40
codegen_flags: <defaults>
</compile_context>

<pallas_src>
import functools

import jax
import jax.numpy as jnp
from jax.experimental import pallas as pl
from jax.experimental.pallas import tpu as pltpu

EPS = float(jnp.finfo(jnp.float32).eps)        # 1.1920929e-07 == torch f32 eps
F32_MAX = float(jnp.finfo(jnp.float32).max)
TINY = 1e-30                                   # log floor (avoids 0*log(0))

NSTAT = 12                                     # packed per-row stats lane width
(S_LOSS, S_PREC, S_EOE, S_EE, S_MI, S_EPKL, S_MKL,
 S_ENS_MKL, S_ENS_PREC, S_ENS_EOE, S_ENS_MI, S_AMIN) = range(NSTAT)


# ----------------------------- helpers ---------------------------------------

def _recip(x):
    """Approx EUP reciprocal + one Newton step (VALU): ~exact f32 divide, cheaper."""
    r = pl.reciprocal(x, approx=True)
    return r * (2.0 - x * r)


def _digamma(x):
    """digamma(x) for x > 0: 6-step upward recurrence + Stirling series."""
    s = _recip(x)
    for k in range(1, 6):
        s = s + _recip(x + float(k))
    z = x + 6.0
    zi = _recip(z)
    zi2 = zi * zi
    psi = (jnp.log(z) - 0.5 * zi
           - zi2 * (1.0 / 12.0 - zi2 * (1.0 / 120.0 - zi2 * (1.0 / 252.0))))
    return psi - s


def _lgamma(x):
    """lgamma(x) for x > 0: 6-step recurrence (3 pairwise-product logs) + Stirling."""
    s = (jnp.log(x * (x + 1.0))
         + jnp.log((x + 2.0) * (x + 3.0))
         + jnp.log((x + 4.0) * (x + 5.0)))
    z = x + 6.0
    zi = _recip(z)
    zi2 = zi * zi
    lg = ((z - 0.5) * jnp.log(z) - z + 0.9189385332046727
          + zi * (1.0 / 12.0 - zi2 * (1.0 / 360.0 - zi2 * (1.0 / 1260.0))))
    return lg - s


def _rowsum(x):
    # XLU cross-lane reduce (exact f32); kept off the MXU so the loss-path
    # reductions don't get rounded to bf16 by default matmul precision.
    return jnp.sum(x, axis=-1, keepdims=True)


# --------------------------------- kernel ------------------------------------

def _rkl_kernel(mask_ref, logits_ref, targets_ref,
                stats_ref, ens_mean_ref, ens_logp_ref,
                *, model_offset, target_offset):
    logits = logits_ref[...]                              # (TB, C) f32
    tb, C = logits.shape
    M = targets_ref.shape[1]
    nc = float(C)
    inv_m = 1.0 / float(M)
    uniform = 1.0 / nc
    log_eps = 0.0001 / nc

    valid = mask_ref[...] > 0.5                           # (TB, 1) bool

    # -------------- ensemble statistics, streamed member-by-member ----------
    sum_t = jnp.zeros((tb, C), jnp.float32)
    sum_logp = jnp.zeros((tb, C), jnp.float32)
    sum_ent = jnp.zeros((tb, 1), jnp.float32)
    for m in range(M):                                    # static unroll; one member live
        t_m = jnp.where(valid, targets_ref[:, m, :], uniform)  # sanitize ignored rows
        logp_m = jnp.log(t_m + log_eps)                   # the single (TB,C) log per member
        rs = _rowsum(t_m)
        # per-member categorical entropy: log t_norm = log t - log rowsum
        ent_m = -_rowsum((t_m * _recip(rs)) * (logp_m - jnp.log(rs)))
        sum_t = sum_t + t_m
        sum_logp = sum_logp + logp_m
        sum_ent = sum_ent + ent_m
        ens_logp_ref[:, m, :] = logp_m                    # emitted: targets already in VMEM

    mean_p = sum_t * inv_m                                # (TB, C)
    mean_logp = sum_logp * inv_m
    ens_ee = sum_ent * inv_m                              # (TB, 1)

    log_mean_p = jnp.log(mean_p + TINY)
    rs_mp = _rowsum(mean_p)
    ens_eoe = -_rowsum((mean_p * _recip(rs_mp)) * (log_mean_p - jnp.log(rs_mp)))
    ens_mi = ens_eoe - ens_ee
    ens_mkl = _rowsum(mean_p * (log_mean_p - mean_logp))
    # ensemble precision, including the in-place target offset from forward()
    ens_prec = (nc - 1.0) * _recip(2.0 * ens_mkl + EPS) + target_offset * nc

    # ----------------------- model Dirichlet parameters ----------------------
    max_val = F32_MAX / nc - 1.0
    alphas = jnp.minimum(jnp.exp(logits) + model_offset, max_val)   # (TB, C)
    prec_col = _rowsum(alphas)                                      # (TB, 1)
    inv_prec = _recip(prec_col)
    p = alphas * inv_prec
    logp_eps = jnp.log(p + EPS)

    a_eps = alphas + EPS
    pc_eps = prec_col + EPS
    dg_a = _digamma(a_eps)                       # only (TB, C) digamma pass
    dg_p = _digamma(pc_eps)                      # (TB, 1)
    dg_a1 = dg_a + _recip(a_eps)                 # psi(x+1) = psi(x) + 1/x
    dg_p1 = dg_p + _recip(pc_eps)

    # ----------------------- Dirichlet uncertainties -------------------------
    eoe = -_rowsum(p * logp_eps)
    ee = -_rowsum(p * (dg_a1 - dg_p1))
    mi = eoe - ee                                # EPS-weighted diff vs ref, below f32 noise
    epkl = (nc - 1.0) * inv_prec
    mkl = _rowsum(p * (logp_eps - dg_a + dg_p))

    eoe = jnp.maximum(eoe, 0.0)
    ee = jnp.maximum(ee, 0.0)
    mi = jnp.maximum(mi, 0.0)
    epkl = jnp.maximum(epkl, 0.0)
    mkl = jnp.maximum(mkl, 0.0)

    # ----------------------- RKL mediator loss -------------------------------
    expected_kl_term = -_rowsum(mean_p * (dg_a - dg_p))
    dne = (_rowsum(_lgamma(a_eps)) - _lgamma(pc_eps)
           - _rowsum((dg_a - dg_p) * (alphas - 1.0)))
    loss = expected_kl_term - dne * _recip(ens_prec)      # (TB, 1)
    loss = jnp.where(valid, loss, 0.0)

    # per-row alpha min (precision column already carries sum(alphas) per row)
    row_min = jnp.where(valid, jnp.min(alphas, axis=-1, keepdims=True), F32_MAX)

    # ----------------------- packed per-row stats -----------------------------
    cols = (loss, prec_col, eoe, ee, mi, epkl, mkl,
            ens_mkl, ens_prec, ens_eoe, ens_mi, row_min)
    for k, col in enumerate(cols):
        stats_ref[:, k:k + 1] = col

    ens_mean_ref[...] = mean_p


# --------------------------------- wrapper ------------------------------------

def _round_up(x, m):
    return ((x + m - 1) // m) * m


def _vmem_budget():
    """(vmem_limit_bytes, tile budget) sized per generation (v5e/v6e: 128 MiB,
    v7x: 64 MiB physical)."""
    try:
        cap = int(pltpu.get_tpu_info().vmem_capacity_bytes)
        if cap <= 0:
            raise ValueError("bad vmem capacity")
    except Exception:
        cap = 64 * 1024 * 1024                     # conservative fallback (v7x)
    limit = max(32 * 1024 * 1024, min(cap // 2, 96 * 1024 * 1024))
    budget = max(8 * 1024 * 1024, limit - 8 * 1024 * 1024)   # headroom
    return limit, budget


def _choose_tb(B, M, C, budget_bytes):
    # Per-row VMEM bytes: double-buffered targets-in + ens_logp-out (2*2*M*C f32),
    # double-buffered logits / ens_mean (2*2*C), mask/stats (~64 B), plus ~24
    # live (row, C) f32 temporaries in the kernel body.
    per_row = 4 * (4 * M * C + 4 * C + 24 * C + 64)
    tb = max(8, (budget_bytes // per_row) // 8 * 8)
    b8 = _round_up(B, 8)
    tb = min(tb, 2048, b8)
    # Keep >= 2 grid steps when the batch allows it, so v7x's two TensorCores
    # both get work ("parallel" batch axis); no-op on single-TC v5e/v6e.
    if b8 >= 16:
        tb = min(tb, max(8, (b8 // 2) // 8 * 8))
    return max(8, (tb // 8) * 8)


def _rkl_pallas(mask, logits, targets, model_offset, target_offset):
    B, C = logits.shape
    _, M, _ = targets.shape

    vmem_limit, budget = _vmem_budget()
    tb = _choose_tb(B, M, C, budget)

    Bp = _round_up(B, tb)
    if Bp != B:
        pad = Bp - B
        logits = jnp.pad(logits, ((0, pad), (0, 0)))
        targets = jnp.pad(targets, ((0, pad), (0, 0), (0, 0)))
        mask = jnp.pad(mask, ((0, pad), (0, 0)))

    kernel = functools.partial(_rkl_kernel,
                               model_offset=float(model_offset),
                               target_offset=float(target_offset))

    out_shapes = (
        jax.ShapeDtypeStruct((Bp, NSTAT), jnp.float32),   # packed per-row stats
        jax.ShapeDtypeStruct((Bp, C), jnp.float32),       # ensemble mean probs
        jax.ShapeDtypeStruct((Bp, M, C), jnp.float32),    # ensemble logprobs
    )
    in_specs = [
        pl.BlockSpec((tb, 1), lambda i: (i, 0)),          # mask
        pl.BlockSpec((tb, C), lambda i: (i, 0)),          # logits
        pl.BlockSpec((tb, M, C), lambda i: (i, 0, 0)),    # targets
    ]
    out_specs = (
        pl.BlockSpec((tb, NSTAT), lambda i: (i, 0)),
        pl.BlockSpec((tb, C), lambda i: (i, 0)),
        pl.BlockSpec((tb, M, C), lambda i: (i, 0, 0)),
    )

    packed, ens_mean, ens_logp = pl.pallas_call(
        kernel,
        grid=(Bp // tb,),
        in_specs=in_specs,
        out_specs=out_specs,
        out_shape=out_shapes,
        compiler_params=pltpu.CompilerParams(
            dimension_semantics=("parallel",),
            vmem_limit_bytes=int(vmem_limit),
        ),
    )(mask, logits, targets)

    return packed[:B], ens_mean[:B], ens_logp[:B]


def rkl_dirichlet_mediator_loss(logits, targets, *, model_offset=1.0,
                                target_offset=1.0, ignore_index=-1):
    """Forward pass of RKLDirichletMediatorLoss. Returns (loss, stats, ensemble_stats).

    Fully static-shape (jit-friendly): ignored turns are masked, not filtered.
    """
    logits = logits.astype(jnp.float32)
    targets = targets.astype(jnp.float32)
    B, C = logits.shape
    num_classes = float(C)

    valid = targets[:, 0, 0] != ignore_index                       # (B,)
    mask = valid.astype(jnp.float32)[:, None]                      # (B, 1)

    packed, ens_mean, ens_logp = _rkl_pallas(
        mask, logits, targets, model_offset, target_offset)

    m = mask[:, 0]
    n_valid = jnp.maximum(jnp.sum(m), 1.0)
    loss = jnp.sum(packed[:, S_LOSS] * m) / n_valid

    # alpha_min / alpha_mean over valid turns only (matches filtered reference);
    # invalid rows carry +F32_MAX in the packed min lane and are zero-masked for mean.
    alpha_min = jnp.min(packed[:, S_AMIN])
    alpha_mean = jnp.sum(packed[:, S_PREC] * m) / (n_valid * num_classes)

    stats = {
        "alpha_min": alpha_min,
        "alpha_mean": alpha_mean,
        "precision": packed[:, S_PREC],
        "entropy_of_expected": packed[:, S_EOE],
        "mutual_info": packed[:, S_MI],
        "mkl": packed[:, S_MKL],
        "valid_turns": valid,
    }

    ensemble_stats = {
        "probs": targets,
        "mean_probs": ens_mean,
        "logprobs": ens_logp,
        "mkl": packed[:, S_ENS_MKL],
        "precision": packed[:, S_ENS_PREC:S_ENS_PREC + 1],   # (B, 1), incl. target offset
        "entropy_of_expected": packed[:, S_ENS_EOE],
        "mutual_info": packed[:, S_ENS_MI],
    }
    return loss, stats, ensemble_stats


if __name__ == "__main__":
    key = jax.random.PRNGKey(0)
    B, M, C = 8, 4, 16          # batch of turns, ensemble members, classes
    k1, k2 = jax.random.split(key)

    logits = jax.random.normal(k1, (B, C), dtype=jnp.float32)
    targets = jax.nn.softmax(jax.random.normal(k2, (B, M, C), dtype=jnp.float32), axis=-1)
    # mark two turns as ignored (padding rows, ignore_index = -1)
    targets = targets.at[1].set(-1.0)
    targets = targets.at[5].set(-1.0)

    loss_fn = jax.jit(rkl_dirichlet_mediator_loss)
    loss, stats, ens_stats = loss_fn(logits, targets)
    jax.block_until_ready(loss)

    assert bool(jnp.isfinite(loss)), "loss is not finite"
    assert bool(jnp.all(jnp.isfinite(stats["mkl"]))), "stats not finite"
    assert bool(jnp.all(jnp.isfinite(stats["precision"]))), "precision not finite"
    assert bool(jnp.isfinite(stats["alpha_min"])), "alpha_min not finite"
    assert bool(jnp.all(jnp.isfinite(ens_stats["mkl"]))), "ensemble stats not finite"
    assert bool(jnp.all(jnp.isfinite(ens_stats["logprobs"]))), "ensemble logprobs not finite"
    print("KERNEL_OK")
</pallas_src>

<mosaic_0001>
module attributes {stable_mosaic.version = 11 : i64} {
  func.func @_rkl_kernel(%arg0: i32, %arg1: memref<8x1xf32, #tpu.memory_space<vmem>>, %arg2: memref<8x16xf32, #tpu.memory_space<vmem>>, %arg3: memref<8x4x16xf32, #tpu.memory_space<vmem>>, %arg4: memref<8x12xf32, #tpu.memory_space<vmem>>, %arg5: memref<8x16xf32, #tpu.memory_space<vmem>>, %arg6: memref<8x4x16xf32, #tpu.memory_space<vmem>>) attributes {dimension_semantics = [#tpu.dimension_semantics<parallel>], iteration_bounds = array<i64: 1>, scalar_prefetch = 0 : i64, scratch_operands = 0 : i64, tpu.core_type = #tpu.core_type<tc>, window_params = [{transform_indices = @transform_0, window_bounds = array<i64: 8, 1>}, {transform_indices = @transform_1, window_bounds = array<i64: 8, 16>}, {transform_indices = @transform_2, window_bounds = array<i64: 8, 4, 16>}, {transform_indices = @transform_3, window_bounds = array<i64: 8, 12>}, {transform_indices = @transform_4, window_bounds = array<i64: 8, 16>}, {transform_indices = @transform_5, window_bounds = array<i64: 8, 4, 16>}]} {
    %c0 = arith.constant 0 : index
    %c0_0 = arith.constant 0 : index
    %0 = vector.load %arg2[%c0, %c0_0] : memref<8x16xf32, #tpu.memory_space<vmem>>, vector<8x16xf32>
    %c0_1 = arith.constant 0 : index
    %c0_2 = arith.constant 0 : index
    %1 = vector.load %arg1[%c0_1, %c0_2] : memref<8x1xf32, #tpu.memory_space<vmem>>, vector<8x1xf32>
    %cst = arith.constant 5.000000e-01 : f32
    %2 = vector.broadcast %cst : f32 to vector<8x1xf32>
    %3 = arith.cmpf ogt, %1, %2 : vector<8x1xf32>
    %cst_3 = arith.constant 0.000000e+00 : f32
    %4 = vector.broadcast %cst_3 : f32 to vector<8x16xf32>
    %cst_4 = arith.constant 0.000000e+00 : f32
    %5 = vector.broadcast %cst_4 : f32 to vector<8x16xf32>
    %cst_5 = arith.constant 0.000000e+00 : f32
    %6 = vector.broadcast %cst_5 : f32 to vector<8x1xf32>
    %c0_6 = arith.constant 0 : index
    %c0_7 = arith.constant 0 : index
    %c0_8 = arith.constant 0 : index
    %7 = vector.load %arg3[%c0_6, %c0_7, %c0_8] : memref<8x4x16xf32, #tpu.memory_space<vmem>>, vector<8x1x16xf32>
    %8 = vector.shape_cast %7 : vector<8x1x16xf32> to vector<8x16xf32>
    %cst_9 = arith.constant 6.250000e-02 : f32
    %9 = vector.shape_cast %3 : vector<8x1xi1> to vector<8x1xi1>
    %10 = vector.broadcast %9 : vector<8x1xi1> to vector<8x16xi1>
    %11 = vector.broadcast %cst_9 : f32 to vector<8x16xf32>
    %12 = arith.select %10, %8, %11 : vector<8x16xi1>, vector<8x16xf32>
    %cst_10 = arith.constant 6.250000e-06 : f32
    %13 = vector.broadcast %cst_10 : f32 to vector<8x16xf32>
    %14 = arith.addf %12, %13 : vector<8x16xf32>
    %15 = math.log %14 : vector<8x16xf32>
    %cst_11 = arith.constant dense<0.000000e+00> : vector<8xf32>
    %16 = vector.multi_reduction <add>, %12, %cst_11 [1] : vector<8x16xf32> to vector<8xf32>
    %17 = vector.shape_cast %16 : vector<8xf32> to vector<8x1xf32>
    %18 = tpu.reciprocal %17 {approx = true} : vector<8x1xf32> -> vector<8x1xf32>
    %19 = arith.mulf %17, %18 : vector<8x1xf32>
    %cst_12 = arith.constant 2.000000e+00 : f32
    %20 = vector.broadcast %cst_12 : f32 to vector<8x1xf32>
    %21 = arith.subf %20, %19 : vector<8x1xf32>
    %22 = arith.mulf %18, %21 : vector<8x1xf32>
    %23 = vector.broadcast %22 : vector<8x1xf32> to vector<8x16xf32>
    %24 = arith.mulf %12, %23 : vector<8x16xf32>
    %25 = math.log %17 : vector<8x1xf32>
    %26 = vector.broadcast %25 : vector<8x1xf32> to vector<8x16xf32>
    %27 = arith.subf %15, %26 : vector<8x16xf32>
    %28 = arith.mulf %24, %27 : vector<8x16xf32>
    %cst_13 = arith.constant dense<0.000000e+00> : vector<8xf32>
    %29 = vector.multi_reduction <add>, %28, %cst_13 [1] : vector<8x16xf32> to vector<8xf32>
    %30 = vector.shape_cast %29 : vector<8xf32> to vector<8x1xf32>
    %cst_14 = arith.constant 0.000000e+00 : f32
    %31 = vector.broadcast %cst_14 : f32 to vector<8x1xf32>
    %32 = arith.subf %31, %30 : vector<8x1xf32>
    %33 = arith.addf %4, %12 : vector<8x16xf32>
    %34 = arith.addf %5, %15 : vector<8x16xf32>
    %35 = arith.addf %6, %32 : vector<8x1xf32>
    %c0_15 = arith.constant 0 : index
    %c0_16 = arith.constant 0 : index
    %c0_17 = arith.constant 0 : index
    %36 = vector.load %arg6[%c0_15, %c0_16, %c0_17] : memref<8x4x16xf32, #tpu.memory_space<vmem>>, vector<8x1x16xf32>
    %37 = vector.shape_cast %36 : vector<8x1x16xf32> to vector<8x16xf32>
    %38 = vector.shape_cast %15 : vector<8x16xf32> to vector<8x1x16xf32>
    tpu.vector_store %arg6[%c0_15, %c0_16, %c0_17], %38 {strides = array<i32>} : memref<8x4x16xf32, #tpu.memory_space<vmem>>, vector<8x1x16xf32>,
    %c0_18 = arith.constant 0 : index
    %c1 = arith.constant 1 : index
    %c0_19 = arith.constant 0 : index
    %39 = vector.load %arg3[%c0_18, %c1, %c0_19] : memref<8x4x16xf32, #tpu.memory_space<vmem>>, vector<8x1x16xf32>
    %40 = vector.shape_cast %39 : vector<8x1x16xf32> to vector<8x16xf32>
    %cst_20 = arith.constant 6.250000e-02 : f32
    %41 = vector.shape_cast %3 : vector<8x1xi1> to vector<8x1xi1>
    %42 = vector.broadcast %41 : vector<8x1xi1> to vector<8x16xi1>
    %43 = vector.broadcast %cst_20 : f32 to vector<8x16xf32>
    %44 = arith.select %42, %40, %43 : vector<8x16xi1>, vector<8x16xf32>
    %cst_21 = arith.constant 6.250000e-06 : f32
    %45 = vector.broadcast %cst_21 : f32 to vector<8x16xf32>
    %46 = arith.addf %44, %45 : vector<8x16xf32>
    %47 = math.log %46 : vector<8x16xf32>
    %cst_22 = arith.constant dense<0.000000e+00> : vector<8xf32>
    %48 = vector.multi_reduction <add>, %44, %cst_22 [1] : vector<8x16xf32> to vector<8xf32>
    %49 = vector.shape_cast %48 : vector<8xf32> to vector<8x1xf32>
    %50 = tpu.reciprocal %49 {approx = true} : vector<8x1xf32> -> vector<8x1xf32>
    %51 = arith.mulf %49, %50 : vector<8x1xf32>
    %cst_23 = arith.constant 2.000000e+00 : f32
    %52 = vector.broadcast %cst_23 : f32 to vector<8x1xf32>
    %53 = arith.subf %52, %51 : vector<8x1xf32>
    %54 = arith.mulf %50, %53 : vector<8x1xf32>
    %55 = vector.broadcast %54 : vector<8x1xf32> to vector<8x16xf32>
    %56 = arith.mulf %44, %55 : vector<8x16xf32>
    %57 = math.log %49 : vector<8x1xf32>
    %58 = vector.broadcast %57 : vector<8x1xf32> to vector<8x16xf32>
    %59 = arith.subf %47, %58 : vector<8x16xf32>
    %60 = arith.mulf %56, %59 : vector<8x16xf32>
    %cst_24 = arith.constant dense<0.000000e+00> : vector<8xf32>
    %61 = vector.multi_reduction <add>, %60, %cst_24 [1] : vector<8x16xf32> to vector<8xf32>
    %62 = vector.shape_cast %61 : vector<8xf32> to vector<8x1xf32>
    %cst_25 = arith.constant 0.000000e+00 : f32
    %63 = vector.broadcast %cst_25 : f32 to vector<8x1xf32>
    %64 = arith.subf %63, %62 : vector<8x1xf32>
    %65 = arith.addf %33, %44 : vector<8x16xf32>
    %66 = arith.addf %34, %47 : vector<8x16xf32>
    %67 = arith.addf %35, %64 : vector<8x1xf32>
    %c0_26 = arith.constant 0 : index
    %c1_27 = arith.constant 1 : index
    %c0_28 = arith.constant 0 : index
    %68 = vector.load %arg6[%c0_26, %c1_27, %c0_28] : memref<8x4x16xf32, #tpu.memory_space<vmem>>, vector<8x1x16xf32>
    %69 = vector.shape_cast %68 : vector<8x1x16xf32> to vector<8x16xf32>
    %70 = vector.shape_cast %47 : vector<8x16xf32> to vector<8x1x16xf32>
    tpu.vector_store %arg6[%c0_26, %c1_27, %c0_28], %70 {strides = array<i32>} : memref<8x4x16xf32, #tpu.memory_space<vmem>>, vector<8x1x16xf32>,
    %c0_29 = arith.constant 0 : index
    %c2 = arith.constant 2 : index
    %c0_30 = arith.constant 0 : index
    %71 = vector.load %arg3[%c0_29, %c2, %c0_30] : memref<8x4x16xf32, #tpu.memory_space<vmem>>, vector<8x1x16xf32>
    %72 = vector.shape_cast %71 : vector<8x1x16xf32> to vector<8x16xf32>
    %cst_31 = arith.constant 6.250000e-02 : f32
    %73 = vector.shape_cast %3 : vector<8x1xi1> to vector<8x1xi1>
    %74 = vector.broadcast %73 : vector<8x1xi1> to vector<8x16xi1>
    %75 = vector.broadcast %cst_31 : f32 to vector<8x16xf32>
    %76 = arith.select %74, %72, %75 : vector<8x16xi1>, vector<8x16xf32>
    %cst_32 = arith.constant 6.250000e-06 : f32
    %77 = vector.broadcast %cst_32 : f32 to vector<8x16xf32>
    %78 = arith.addf %76, %77 : vector<8x16xf32>
    %79 = math.log %78 : vector<8x16xf32>
    %cst_33 = arith.constant dense<0.000000e+00> : vector<8xf32>
    %80 = vector.multi_reduction <add>, %76, %cst_33 [1] : vector<8x16xf32> to vector<8xf32>
    %81 = vector.shape_cast %80 : vector<8xf32> to vector<8x1xf32>
    %82 = tpu.reciprocal %81 {approx = true} : vector<8x1xf32> -> vector<8x1xf32>
    %83 = arith.mulf %81, %82 : vector<8x1xf32>
    %cst_34 = arith.constant 2.000000e+00 : f32
    %84 = vector.broadcast %cst_34 : f32 to vector<8x1xf32>
    %85 = arith.subf %84, %83 : vector<8x1xf32>
    %86 = arith.mulf %82, %85 : vector<8x1xf32>
    %87 = vector.broadcast %86 : vector<8x1xf32> to vector<8x16xf32>
    %88 = arith.mulf %76, %87 : vector<8x16xf32>
    %89 = math.log %81 : vector<8x1xf32>
    %90 = vector.broadcast %89 : vector<8x1xf32> to vector<8x16xf32>
    %91 = arith.subf %79, %90 : vector<8x16xf32>
    %92 = arith.mulf %88, %91 : vector<8x16xf32>
    %cst_35 = arith.constant dense<0.000000e+00> : vector<8xf32>
    %93 = vector.multi_reduction <add>, %92, %cst_35 [1] : vector<8x16xf32> to vector<8xf32>
    %94 = vector.shape_cast %93 : vector<8xf32> to vector<8x1xf32>
    %cst_36 = arith.constant 0.000000e+00 : f32
    %95 = vector.broadcast %cst_36 : f32 to vector<8x1xf32>
    %96 = arith.subf %95, %94 : vector<8x1xf32>
    %97 = arith.addf %65, %76 : vector<8x16xf32>
    %98 = arith.addf %66, %79 : vector<8x16xf32>
    %99 = arith.addf %67, %96 : vector<8x1xf32>
    %c0_37 = arith.constant 0 : index
    %c2_38 = arith.constant 2 : index
    %c0_39 = arith.constant 0 : index
    %100 = vector.load %arg6[%c0_37, %c2_38, %c0_39] : memref<8x4x16xf32, #tpu.memory_space<vmem>>, vector<8x1x16xf32>
    %101 = vector.shape_cast %100 : vector<8x1x16xf32> to vector<8x16xf32>
    %102 = vector.shape_cast %79 : vector<8x16xf32> to vector<8x1x16xf32>
    tpu.vector_store %arg6[%c0_37, %c2_38, %c0_39], %102 {strides = array<i32>} : memref<8x4x16xf32, #tpu.memory_space<vmem>>, vector<8x1x16xf32>,
    %c0_40 = arith.constant 0 : index
    %c3 = arith.constant 3 : index
    %c0_41 = arith.constant 0 : index
    %103 = vector.load %arg3[%c0_40, %c3, %c0_41] : memref<8x4x16xf32, #tpu.memory_space<vmem>>, vector<8x1x16xf32>
    %104 = vector.shape_cast %103 : vector<8x1x16xf32> to vector<8x16xf32>
    %cst_42 = arith.constant 6.250000e-02 : f32
    %105 = vector.shape_cast %3 : vector<8x1xi1> to vector<8x1xi1>
    %106 = vector.broadcast %105 : vector<8x1xi1> to vector<8x16xi1>
    %107 = vector.broadcast %cst_42 : f32 to vector<8x16xf32>
    %108 = arith.select %106, %104, %107 : vector<8x16xi1>, vector<8x16xf32>
    %cst_43 = arith.constant 6.250000e-06 : f32
    %109 = vector.broadcast %cst_43 : f32 to vector<8x16xf32>
    %110 = arith.addf %108, %109 : vector<8x16xf32>
    %111 = math.log %110 : vector<8x16xf32>
    %cst_44 = arith.constant dense<0.000000e+00> : vector<8xf32>
    %112 = vector.multi_reduction <add>, %108, %cst_44 [1] : vector<8x16xf32> to vector<8xf32>
    %113 = vector.shape_cast %112 : vector<8xf32> to vector<8x1xf32>
    %114 = tpu.reciprocal %113 {approx = true} : vector<8x1xf32> -> vector<8x1xf32>
    %115 = arith.mulf %113, %114 : vector<8x1xf32>
    %cst_45 = arith.constant 2.000000e+00 : f32
    %116 = vector.broadcast %cst_45 : f32 to vector<8x1xf32>
    %117 = arith.subf %116, %115 : vector<8x1xf32>
    %118 = arith.mulf %114, %117 : vector<8x1xf32>
    %119 = vector.broadcast %118 : vector<8x1xf32> to vector<8x16xf32>
    %120 = arith.mulf %108, %119 : vector<8x16xf32>
    %121 = math.log %113 : vector<8x1xf32>
    %122 = vector.broadcast %121 : vector<8x1xf32> to vector<8x16xf32>
    %123 = arith.subf %111, %122 : vector<8x16xf32>
    %124 = arith.mulf %120, %123 : vector<8x16xf32>
    %cst_46 = arith.constant dense<0.000000e+00> : vector<8xf32>
    %125 = vector.multi_reduction <add>, %124, %cst_46 [1] : vector<8x16xf32> to vector<8xf32>
    %126 = vector.shape_cast %125 : vector<8xf32> to vector<8x1xf32>
    %cst_47 = arith.constant 0.000000e+00 : f32
    %127 = vector.broadcast %cst_47 : f32 to vector<8x1xf32>
    %128 = arith.subf %127, %126 : vector<8x1xf32>
    %129 = arith.addf %97, %108 : vector<8x16xf32>
    %130 = arith.addf %98, %111 : vector<8x16xf32>
    %131 = arith.addf %99, %128 : vector<8x1xf32>
    %c0_48 = arith.constant 0 : index
    %c3_49 = arith.constant 3 : index
    %c0_50 = arith.constant 0 : index
    %132 = vector.load %arg6[%c0_48, %c3_49, %c0_50] : memref<8x4x16xf32, #tpu.memory_space<vmem>>, vector<8x1x16xf32>
    %133 = vector.shape_cast %132 : vector<8x1x16xf32> to vector<8x16xf32>
    %134 = vector.shape_cast %111 : vector<8x16xf32> to vector<8x1x16xf32>
    tpu.vector_store %arg6[%c0_48, %c3_49, %c0_50], %134 {strides = array<i32>} : memref<8x4x16xf32, #tpu.memory_space<vmem>>, vector<8x1x16xf32>,
    %cst_51 = arith.constant 2.500000e-01 : f32
    %135 = vector.broadcast %cst_51 : f32 to vector<8x16xf32>
    %136 = arith.mulf %129, %135 : vector<8x16xf32>
    %cst_52 = arith.constant 2.500000e-01 : f32
    %137 = vector.broadcast %cst_52 : f32 to vector<8x16xf32>
    %138 = arith.mulf %130, %137 : vector<8x16xf32>
    %cst_53 = arith.constant 2.500000e-01 : f32
    %139 = vector.broadcast %cst_53 : f32 to vector<8x1xf32>
    %140 = arith.mulf %131, %139 : vector<8x1xf32>
    %cst_54 = arith.constant 1.000000e-30 : f32
    %141 = vector.broadcast %cst_54 : f32 to vector<8x16xf32>
    %142 = arith.addf %136, %141 : vector<8x16xf32>
    %143 = math.log %142 : vector<8x16xf32>
    %cst_55 = arith.constant dense<0.000000e+00> : vector<8xf32>
    %144 = vector.multi_reduction <add>, %136, %cst_55 [1] : vector<8x16xf32> to vector<8xf32>
    %145 = vector.shape_cast %144 : vector<8xf32> to vector<8x1xf32>
    %146 = tpu.reciprocal %145 {approx = true} : vector<8x1xf32> -> vector<8x1xf32>
    %147 = arith.mulf %145, %146 : vector<8x1xf32>
    %cst_56 = arith.constant 2.000000e+00 : f32
    %148 = vector.broadcast %cst_56 : f32 to vector<8x1xf32>
    %149 = arith.subf %148, %147 : vector<8x1xf32>
    %150 = arith.mulf %146, %149 : vector<8x1xf32>
    %151 = vector.broadcast %150 : vector<8x1xf32> to vector<8x16xf32>
    %152 = arith.mulf %136, %151 : vector<8x16xf32>
    %153 = math.log %145 : vector<8x1xf32>
    %154 = vector.broadcast %153 : vector<8x1xf32> to vector<8x16xf32>
    %155 = arith.subf %143, %154 : vector<8x16xf32>
    %156 = arith.mulf %152, %155 : vector<8x16xf32>
    %cst_57 = arith.constant dense<0.000000e+00> : vector<8xf32>
    %157 = vector.multi_reduction <add>, %156, %cst_57 [1] : vector<8x16xf32> to vector<8xf32>
    %158 = vector.shape_cast %157 : vector<8xf32> to vector<8x1xf32>
    %cst_58 = arith.constant 0.000000e+00 : f32
    %159 = vector.broadcast %cst_58 : f32 to vector<8x1xf32>
    %160 = arith.subf %159, %158 : vector<8x1xf32>
    %161 = arith.subf %160, %140 : vector<8x1xf32>
    %162 = arith.subf %143, %138 : vector<8x16xf32>
    %163 = arith.mulf %136, %162 : vector<8x16xf32>
    %cst_59 = arith.constant dense<0.000000e+00> : vector<8xf32>
    %164 = vector.multi_reduction <add>, %163, %cst_59 [1] : vector<8x16xf32> to vector<8xf32>
    %165 = vector.shape_cast %164 : vector<8xf32> to vector<8x1xf32>
    %cst_60 = arith.constant 2.000000e+00 : f32
    %166 = vector.broadcast %cst_60 : f32 to vector<8x1xf32>
    %167 = arith.mulf %166, %165 : vector<8x1xf32>
    %cst_61 = arith.constant 1.1920929E-7 : f32
    %168 = vector.broadcast %cst_61 : f32 to vector<8x1xf32>
    %169 = arith.addf %167, %168 : vector<8x1xf32>
    %170 = tpu.reciprocal %169 {approx = true} : vector<8x1xf32> -> vector<8x1xf32>
    %171 = arith.mulf %169, %170 : vector<8x1xf32>
    %cst_62 = arith.constant 2.000000e+00 : f32
    %172 = vector.broadcast %cst_62 : f32 to vector<8x1xf32>
    %173 = arith.subf %172, %171 : vector<8x1xf32>
    %174 = arith.mulf %170, %173 : vector<8x1xf32>
    %cst_63 = arith.constant 1.500000e+01 : f32
    %175 = vector.broadcast %cst_63 : f32 to vector<8x1xf32>
    %176 = arith.mulf %175, %174 : vector<8x1xf32>
    %cst_64 = arith.constant 1.600000e+01 : f32
    %177 = vector.broadcast %cst_64 : f32 to vector<8x1xf32>
    %178 = arith.addf %176, %177 : vector<8x1xf32>
    %179 = math.exp %0 : vector<8x16xf32>
    %cst_65 = arith.constant 1.000000e+00 : f32
    %180 = vector.broadcast %cst_65 : f32 to vector<8x16xf32>
    %181 = arith.addf %179, %180 : vector<8x16xf32>
    %cst_66 = arith.constant 2.12676467E+37 : f32
    %182 = vector.broadcast %cst_66 : f32 to vector<8x16xf32>
    %183 = arith.minimumf %181, %182 : vector<8x16xf32>
    %cst_67 = arith.constant dense<0.000000e+00> : vector<8xf32>
    %184 = vector.multi_reduction <add>, %183, %cst_67 [1] : vector<8x16xf32> to vector<8xf32>
    %185 = vector.shape_cast %184 : vector<8xf32> to vector<8x1xf32>
    %186 = tpu.reciprocal %185 {approx = true} : vector<8x1xf32> -> vector<8x1xf32>
    %187 = arith.mulf %185, %186 : vector<8x1xf32>
    %cst_68 = arith.constant 2.000000e+00 : f32
    %188 = vector.broadcast %cst_68 : f32 to vector<8x1xf32>
    %189 = arith.subf %188, %187 : vector<8x1xf32>
    %190 = arith.mulf %186, %189 : vector<8x1xf32>
    %191 = vector.broadcast %190 : vector<8x1xf32> to vector<8x16xf32>
    %192 = arith.mulf %183, %191 : vector<8x16xf32>
    %cst_69 = arith.constant 1.1920929E-7 : f32
    %193 = vector.broadcast %cst_69 : f32 to vector<8x16xf32>
    %194 = arith.addf %192, %193 : vector<8x16xf32>
    %195 = math.log %194 : vector<8x16xf32>
    %cst_70 = arith.constant 1.1920929E-7 : f32
    %196 = vector.broadcast %cst_70 : f32 to vector<8x16xf32>
    %197 = arith.addf %183, %196 : vector<8x16xf32>
    %cst_71 = arith.constant 1.1920929E-7 : f32
    %198 = vector.broadcast %cst_71 : f32 to vector<8x1xf32>
    %199 = arith.addf %185, %198 : vector<8x1xf32>
    %200 = tpu.reciprocal %197 {approx = true} : vector<8x16xf32> -> vector<8x16xf32>
    %201 = arith.mulf %197, %200 : vector<8x16xf32>
    %cst_72 = arith.constant 2.000000e+00 : f32
    %202 = vector.broadcast %cst_72 : f32 to vector<8x16xf32>
    %203 = arith.subf %202, %201 : vector<8x16xf32>
    %204 = arith.mulf %200, %203 : vector<8x16xf32>
    %cst_73 = arith.constant 1.000000e+00 : f32
    %205 = vector.broadcast %cst_73 : f32 to vector<8x16xf32>
    %206 = arith.addf %197, %205 : vector<8x16xf32>
    %207 = tpu.reciprocal %206 {approx = true} : vector<8x16xf32> -> vector<8x16xf32>
    %208 = arith.mulf %206, %207 : vector<8x16xf32>
    %cst_74 = arith.constant 2.000000e+00 : f32
    %209 = vector.broadcast %cst_74 : f32 to vector<8x16xf32>
    %210 = arith.subf %209, %208 : vector<8x16xf32>
    %211 = arith.mulf %207, %210 : vector<8x16xf32>
    %212 = arith.addf %204, %211 : vector<8x16xf32>
    %cst_75 = arith.constant 2.000000e+00 : f32
    %213 = vector.broadcast %cst_75 : f32 to vector<8x16xf32>
    %214 = arith.addf %197, %213 : vector<8x16xf32>
    %215 = tpu.reciprocal %214 {approx = true} : vector<8x16xf32> -> vector<8x16xf32>
    %216 = arith.mulf %214, %215 : vector<8x16xf32>
    %cst_76 = arith.constant 2.000000e+00 : f32
    %217 = vector.broadcast %cst_76 : f32 to vector<8x16xf32>
    %218 = arith.subf %217, %216 : vector<8x16xf32>
    %219 = arith.mulf %215, %218 : vector<8x16xf32>
    %220 = arith.addf %212, %219 : vector<8x16xf32>
    %cst_77 = arith.constant 3.000000e+00 : f32
    %221 = vector.broadcast %cst_77 : f32 to vector<8x16xf32>
    %222 = arith.addf %197, %221 : vector<8x16xf32>
    %223 = tpu.reciprocal %222 {approx = true} : vector<8x16xf32> -> vector<8x16xf32>
    %224 = arith.mulf %222, %223 : vector<8x16xf32>
    %cst_78 = arith.constant 2.000000e+00 : f32
    %225 = vector.broadcast %cst_78 : f32 to vector<8x16xf32>
    %226 = arith.subf %225, %224 : vector<8x16xf32>
    %227 = arith.mulf %223, %226 : vector<8x16xf32>
    %228 = arith.addf %220, %227 : vector<8x16xf32>
    %cst_79 = arith.constant 4.000000e+00 : f32
    %229 = vector.broadcast %cst_79 : f32 to vector<8x16xf32>
    %230 = arith.addf %197, %229 : vector<8x16xf32>
    %231 = tpu.reciprocal %230 {approx = true} : vector<8x16xf32> -> vector<8x16xf32>
    %232 = arith.mulf %230, %231 : vector<8x16xf32>
    %cst_80 = arith.constant 2.000000e+00 : f32
    %233 = vector.broadcast %cst_80 : f32 to vector<8x16xf32>
    %234 = arith.subf %233, %232 : vector<8x16xf32>
    %235 = arith.mulf %231, %234 : vector<8x16xf32>
    %236 = arith.addf %228, %235 : vector<8x16xf32>
    %cst_81 = arith.constant 5.000000e+00 : f32
    %237 = vector.broadcast %cst_81 : f32 to vector<8x16xf32>
    %238 = arith.addf %197, %237 : vector<8x16xf32>
    %239 = tpu.reciprocal %238 {approx = true} : vector<8x16xf32> -> vector<8x16xf32>
    %240 = arith.mulf %238, %239 : vector<8x16xf32>
    %cst_82 = arith.constant 2.000000e+00 : f32
    %241 = vector.broadcast %cst_82 : f32 to vector<8x16xf32>
    %242 = arith.subf %241, %240 : vector<8x16xf32>
    %243 = arith.mulf %239, %242 : vector<8x16xf32>
    %244 = arith.addf %236, %243 : vector<8x16xf32>
    %cst_83 = arith.constant 6.000000e+00 : f32
    %245 = vector.broadcast %cst_83 : f32 to vector<8x16xf32>
    %246 = arith.addf %197, %245 : vector<8x16xf32>
    %247 = tpu.reciprocal %246 {approx = true} : vector<8x16xf32> -> vector<8x16xf32>
    %248 = arith.mulf %246, %247 : vector<8x16xf32>
    %cst_84 = arith.constant 2.000000e+00 : f32
    %249 = vector.broadcast %cst_84 : f32 to vector<8x16xf32>
    %250 = arith.subf %249, %248 : vector<8x16xf32>
    %251 = arith.mulf %247, %250 : vector<8x16xf32>
    %252 = arith.mulf %251, %251 : vector<8x16xf32>
    %253 = math.log %246 : vector<8x16xf32>
    %cst_85 = arith.constant 5.000000e-01 : f32
    %254 = vector.broadcast %cst_85 : f32 to vector<8x16xf32>
    %255 = arith.mulf %254, %251 : vector<8x16xf32>
    %256 = arith.subf %253, %255 : vector<8x16xf32>
    %cst_86 = arith.constant 0.0039682542 : f32
    %257 = vector.broadcast %cst_86 : f32 to vector<8x16xf32>
    %258 = arith.mulf %252, %257 : vector<8x16xf32>
    %cst_87 = arith.constant 0.00833333377 : f32
    %259 = vector.broadcast %cst_87 : f32 to vector<8x16xf32>
    %260 = arith.subf %259, %258 : vector<8x16xf32>
    %261 = arith.mulf %252, %260 : vector<8x16xf32>
    %cst_88 = arith.constant 0.0833333358 : f32
    %262 = vector.broadcast %cst_88 : f32 to vector<8x16xf32>
    %263 = arith.subf %262, %261 : vector<8x16xf32>
    %264 = arith.mulf %252, %263 : vector<8x16xf32>
    %265 = arith.subf %256, %264 : vector<8x16xf32>
    %266 = arith.subf %265, %244 : vector<8x16xf32>
    %267 = tpu.reciprocal %199 {approx = true} : vector<8x1xf32> -> vector<8x1xf32>
    %268 = arith.mulf %199, %267 : vector<8x1xf32>
    %cst_89 = arith.constant 2.000000e+00 : f32
    %269 = vector.broadcast %cst_89 : f32 to vector<8x1xf32>
    %270 = arith.subf %269, %268 : vector<8x1xf32>
    %271 = arith.mulf %267, %270 : vector<8x1xf32>
    %cst_90 = arith.constant 1.000000e+00 : f32
    %272 = vector.broadcast %cst_90 : f32 to vector<8x1xf32>
    %273 = arith.addf %199, %272 : vector<8x1xf32>
    %274 = tpu.reciprocal %273 {approx = true} : vector<8x1xf32> -> vector<8x1xf32>
    %275 = arith.mulf %273, %274 : vector<8x1xf32>
    %cst_91 = arith.constant 2.000000e+00 : f32
    %276 = vector.broadcast %cst_91 : f32 to vector<8x1xf32>
    %277 = arith.subf %276, %275 : vector<8x1xf32>
    %278 = arith.mulf %274, %277 : vector<8x1xf32>
    %279 = arith.addf %271, %278 : vector<8x1xf32>
    %cst_92 = arith.constant 2.000000e+00 : f32
    %280 = vector.broadcast %cst_92 : f32 to vector<8x1xf32>
    %281 = arith.addf %199, %280 : vector<8x1xf32>
    %282 = tpu.reciprocal %281 {approx = true} : vector<8x1xf32> -> vector<8x1xf32>
    %283 = arith.mulf %281, %282 : vector<8x1xf32>
    %cst_93 = arith.constant 2.000000e+00 : f32
    %284 = vector.broadcast %cst_93 : f32 to vector<8x1xf32>
    %285 = arith.subf %284, %283 : vector<8x1xf32>
    %286 = arith.mulf %282, %285 : vector<8x1xf32>
    %287 = arith.addf %279, %286 : vector<8x1xf32>
    %cst_94 = arith.constant 3.000000e+00 : f32
    %288 = vector.broadcast %cst_94 : f32 to vector<8x1xf32>
    %289 = arith.addf %199, %288 : vector<8x1xf32>
    %290 = tpu.reciprocal %289 {approx = true} : vector<8x1xf32> -> vector<8x1xf32>
    %291 = arith.mulf %289, %290 : vector<8x1xf32>
    %cst_95 = arith.constant 2.000000e+00 : f32
    %292 = vector.broadcast %cst_95 : f32 to vector<8x1xf32>
    %293 = arith.subf %292, %291 : vector<8x1xf32>
    %294 = arith.mulf %290, %293 : vector<8x1xf32>
    %295 = arith.addf %287, %294 : vector<8x1xf32>
    %cst_96 = arith.constant 4.000000e+00 : f32
    %296 = vector.broadcast %cst_96 : f32 to vector<8x1xf32>
    %297 = arith.addf %199, %296 : vector<8x1xf32>
    %298 = tpu.reciprocal %297 {approx = true} : vector<8x1xf32> -> vector<8x1xf32>
    %299 = arith.mulf %297, %298 : vector<8x1xf32>
    %cst_97 = arith.constant 2.000000e+00 : f32
    %300 = vector.broadcast %cst_97 : f32 to vector<8x1xf32>
    %301 = arith.subf %300, %299 : vector<8x1xf32>
    %302 = arith.mulf %298, %301 : vector<8x1xf32>
    %303 = arith.addf %295, %302 : vector<8x1xf32>
    %cst_98 = arith.constant 5.000000e+00 : f32
    %304 = vector.broadcast %cst_98 : f32 to vector<8x1xf32>
    %305 = arith.addf %199, %304 : vector<8x1xf32>
    %306 = tpu.reciprocal %305 {approx = true} : vector<8x1xf32> -> vector<8x1xf32>
    %307 = arith.mulf %305, %306 : vector<8x1xf32>
    %cst_99 = arith.constant 2.000000e+00 : f32
    %308 = vector.broadcast %cst_99 : f32 to vector<8x1xf32>
    %309 = arith.subf %308, %307 : vector<8x1xf32>
    %310 = arith.mulf %306, %309 : vector<8x1xf32>
    %311 = arith.addf %303, %310 : vector<8x1xf32>
    %cst_100 = arith.constant 6.000000e+00 : f32
    %312 = vector.broadcast %cst_100 : f32 to vector<8x1xf32>
    %313 = arith.addf %199, %312 : vector<8x1xf32>
    %314 = tpu.reciprocal %313 {approx = true} : vector<8x1xf32> -> vector<8x1xf32>
    %315 = arith.mulf %313, %314 : vector<8x1xf32>
    %cst_101 = arith.constant 2.000000e+00 : f32
    %316 = vector.broadcast %cst_101 : f32 to vector<8x1xf32>
    %317 = arith.subf %316, %315 : vector<8x1xf32>
    %318 = arith.mulf %314, %317 : vector<8x1xf32>
    %319 = arith.mulf %318, %318 : vector<8x1xf32>
    %320 = math.log %313 : vector<8x1xf32>
    %cst_102 = arith.constant 5.000000e-01 : f32
    %321 = vector.broadcast %cst_102 : f32 to vector<8x1xf32>
    %322 = arith.mulf %321, %318 : vector<8x1xf32>
    %323 = arith.subf %320, %322 : vector<8x1xf32>
    %cst_103 = arith.constant 0.0039682542 : f32
    %324 = vector.broadcast %cst_103 : f32 to vector<8x1xf32>
    %325 = arith.mulf %319, %324 : vector<8x1xf32>
    %cst_104 = arith.constant 0.00833333377 : f32
    %326 = vector.broadcast %cst_104 : f32 to vector<8x1xf32>
    %327 = arith.subf %326, %325 : vector<8x1xf32>
    %328 = arith.mulf %319, %327 : vector<8x1xf32>
    %cst_105 = arith.constant 0.0833333358 : f32
    %329 = vector.broadcast %cst_105 : f32 to vector<8x1xf32>
    %330 = arith.subf %329, %328 : vector<8x1xf32>
    %331 = arith.mulf %319, %330 : vector<8x1xf32>
    %332 = arith.subf %323, %331 : vector<8x1xf32>
    %333 = arith.subf %332, %311 : vector<8x1xf32>
    %334 = tpu.reciprocal %197 {approx = true} : vector<8x16xf32> -> vector<8x16xf32>
    %335 = arith.mulf %197, %334 : vector<8x16xf32>
    %cst_106 = arith.constant 2.000000e+00 : f32
    %336 = vector.broadcast %cst_106 : f32 to vector<8x16xf32>
    %337 = arith.subf %336, %335 : vector<8x16xf32>
    %338 = arith.mulf %334, %337 : vector<8x16xf32>
    %339 = arith.addf %266, %338 : vector<8x16xf32>
    %340 = tpu.reciprocal %199 {approx = true} : vector<8x1xf32> -> vector<8x1xf32>
    %341 = arith.mulf %199, %340 : vector<8x1xf32>
    %cst_107 = arith.constant 2.000000e+00 : f32
    %342 = vector.broadcast %cst_107 : f32 to vector<8x1xf32>
    %343 = arith.subf %342, %341 : vector<8x1xf32>
    %344 = arith.mulf %340, %343 : vector<8x1xf32>
    %345 = arith.addf %333, %344 : vector<8x1xf32>
    %346 = arith.mulf %192, %195 : vector<8x16xf32>
    %cst_108 = arith.constant dense<0.000000e+00> : vector<8xf32>
    %347 = vector.multi_reduction <add>, %346, %cst_108 [1] : vector<8x16xf32> to vector<8xf32>
    %348 = vector.shape_cast %347 : vector<8xf32> to vector<8x1xf32>
    %cst_109 = arith.constant 0.000000e+00 : f32
    %349 = vector.broadcast %cst_109 : f32 to vector<8x1xf32>
    %350 = arith.subf %349, %348 : vector<8x1xf32>
    %351 = vector.broadcast %345 : vector<8x1xf32> to vector<8x16xf32>
    %352 = arith.subf %339, %351 : vector<8x16xf32>
    %353 = arith.mulf %192, %352 : vector<8x16xf32>
    %cst_110 = arith.constant dense<0.000000e+00> : vector<8xf32>
    %354 = vector.multi_reduction <add>, %353, %cst_110 [1] : vector<8x16xf32> to vector<8xf32>
    %355 = vector.shape_cast %354 : vector<8xf32> to vector<8x1xf32>
    %cst_111 = arith.constant 0.000000e+00 : f32
    %356 = vector.broadcast %cst_111 : f32 to vector<8x1xf32>
    %357 = arith.subf %356, %355 : vector<8x1xf32>
    %358 = arith.subf %350, %357 : vector<8x1xf32>
    %cst_112 = arith.constant 1.500000e+01 : f32
    %359 = vector.broadcast %cst_112 : f32 to vector<8x1xf32>
    %360 = arith.mulf %359, %190 : vector<8x1xf32>
    %361 = arith.subf %195, %266 : vector<8x16xf32>
    %362 = vector.broadcast %333 : vector<8x1xf32> to vector<8x16xf32>
    %363 = arith.addf %361, %362 : vector<8x16xf32>
    %364 = arith.mulf %192, %363 : vector<8x16xf32>
    %cst_113 = arith.constant dense<0.000000e+00> : vector<8xf32>
    %365 = vector.multi_reduction <add>, %364, %cst_113 [1] : vector<8x16xf32> to vector<8xf32>
    %366 = vector.shape_cast %365 : vector<8xf32> to vector<8x1xf32>
    %cst_114 = arith.constant 0.000000e+00 : f32
    %367 = vector.broadcast %cst_114 : f32 to vector<8x1xf32>
    %368 = arith.maximumf %350, %367 : vector<8x1xf32>
    %cst_115 = arith.constant 0.000000e+00 : f32
    %369 = vector.broadcast %cst_115 : f32 to vector<8x1xf32>
    %370 = arith.maximumf %357, %369 : vector<8x1xf32>
    %cst_116 = arith.constant 0.000000e+00 : f32
    %371 = vector.broadcast %cst_116 : f32 to vector<8x1xf32>
    %372 = arith.maximumf %358, %371 : vector<8x1xf32>
    %cst_117 = arith.constant 0.000000e+00 : f32
    %373 = vector.broadcast %cst_117 : f32 to vector<8x1xf32>
    %374 = arith.maximumf %360, %373 : vector<8x1xf32>
    %cst_118 = arith.constant 0.000000e+00 : f32
    %375 = vector.broadcast %cst_118 : f32 to vector<8x1xf32>
    %376 = arith.maximumf %366, %375 : vector<8x1xf32>
    %377 = vector.broadcast %333 : vector<8x1xf32> to vector<8x16xf32>
    %378 = arith.subf %266, %377 : vector<8x16xf32>
    %379 = arith.mulf %136, %378 : vector<8x16xf32>
    %cst_119 = arith.constant dense<0.000000e+00> : vector<8xf32>
    %380 = vector.multi_reduction <add>, %379, %cst_119 [1] : vector<8x16xf32> to vector<8xf32>
    %381 = vector.shape_cast %380 : vector<8xf32> to vector<8x1xf32>
    %cst_120 = arith.constant 0.000000e+00 : f32
    %382 = vector.broadcast %cst_120 : f32 to vector<8x1xf32>
    %383 = arith.subf %382, %381 : vector<8x1xf32>
    %cst_121 = arith.constant 1.000000e+00 : f32
    %384 = vector.broadcast %cst_121 : f32 to vector<8x16xf32>
    %385 = arith.addf %197, %384 : vector<8x16xf32>
    %386 = arith.mulf %197, %385 : vector<8x16xf32>
    %387 = math.log %386 : vector<8x16xf32>
    %cst_122 = arith.constant 2.000000e+00 : f32
    %388 = vector.broadcast %cst_122 : f32 to vector<8x16xf32>
    %389 = arith.addf %197, %388 : vector<8x16xf32>
    %cst_123 = arith.constant 3.000000e+00 : f32
    %390 = vector.broadcast %cst_123 : f32 to vector<8x16xf32>
    %391 = arith.addf %197, %390 : vector<8x16xf32>
    %392 = arith.mulf %389, %391 : vector<8x16xf32>
    %393 = math.log %392 : vector<8x16xf32>
    %394 = arith.addf %387, %393 : vector<8x16xf32>
    %cst_124 = arith.constant 4.000000e+00 : f32
    %395 = vector.broadcast %cst_124 : f32 to vector<8x16xf32>
    %396 = arith.addf %197, %395 : vector<8x16xf32>
    %cst_125 = arith.constant 5.000000e+00 : f32
    %397 = vector.broadcast %cst_125 : f32 to vector<8x16xf32>
    %398 = arith.addf %197, %397 : vector<8x16xf32>
    %399 = arith.mulf %396, %398 : vector<8x16xf32>
    %400 = math.log %399 : vector<8x16xf32>
    %401 = arith.addf %394, %400 : vector<8x16xf32>
    %cst_126 = arith.constant 6.000000e+00 : f32
    %402 = vector.broadcast %cst_126 : f32 to vector<8x16xf32>
    %403 = arith.addf %197, %402 : vector<8x16xf32>
    %404 = tpu.reciprocal %403 {approx = true} : vector<8x16xf32> -> vector<8x16xf32>
    %405 = arith.mulf %403, %404 : vector<8x16xf32>
    %cst_127 = arith.constant 2.000000e+00 : f32
    %406 = vector.broadcast %cst_127 : f32 to vector<8x16xf32>
    %407 = arith.subf %406, %405 : vector<8x16xf32>
    %408 = arith.mulf %404, %407 : vector<8x16xf32>
    %409 = arith.mulf %408, %408 : vector<8x16xf32>
    %cst_128 = arith.constant 5.000000e-01 : f32
    %410 = vector.broadcast %cst_128 : f32 to vector<8x16xf32>
    %411 = arith.subf %403, %410 : vector<8x16xf32>
    %412 = math.log %403 : vector<8x16xf32>
    %413 = arith.mulf %411, %412 : vector<8x16xf32>
    %414 = arith.subf %413, %403 : vector<8x16xf32>
    %cst_129 = arith.constant 0.918938517 : f32
    %415 = vector.broadcast %cst_129 : f32 to vector<8x16xf32>
    %416 = arith.addf %414, %415 : vector<8x16xf32>
    %cst_130 = arith.constant 7.93650805E-4 : f32
    %417 = vector.broadcast %cst_130 : f32 to vector<8x16xf32>
    %418 = arith.mulf %409, %417 : vector<8x16xf32>
    %cst_131 = arith.constant 0.00277777785 : f32
    %419 = vector.broadcast %cst_131 : f32 to vector<8x16xf32>
    %420 = arith.subf %419, %418 : vector<8x16xf32>
    %421 = arith.mulf %409, %420 : vector<8x16xf32>
    %cst_132 = arith.constant 0.0833333358 : f32
    %422 = vector.broadcast %cst_132 : f32 to vector<8x16xf32>
    %423 = arith.subf %422, %421 : vector<8x16xf32>
    %424 = arith.mulf %408, %423 : vector<8x16xf32>
    %425 = arith.addf %416, %424 : vector<8x16xf32>
    %426 = arith.subf %425, %401 : vector<8x16xf32>
    %cst_133 = arith.constant dense<0.000000e+00> : vector<8xf32>
    %427 = vector.multi_reduction <add>, %426, %cst_133 [1] : vector<8x16xf32> to vector<8xf32>
    %428 = vector.shape_cast %427 : vector<8xf32> to vector<8x1xf32>
    %cst_134 = arith.constant 1.000000e+00 : f32
    %429 = vector.broadcast %cst_134 : f32 to vector<8x1xf32>
    %430 = arith.addf %199, %429 : vector<8x1xf32>
    %431 = arith.mulf %199, %430 : vector<8x1xf32>
    %432 = math.log %431 : vector<8x1xf32>
    %cst_135 = arith.constant 2.000000e+00 : f32
    %433 = vector.broadcast %cst_135 : f32 to vector<8x1xf32>
    %434 = arith.addf %199, %433 : vector<8x1xf32>
    %cst_136 = arith.constant 3.000000e+00 : f32
    %435 = vector.broadcast %cst_136 : f32 to vector<8x1xf32>
    %436 = arith.addf %199, %435 : vector<8x1xf32>
    %437 = arith.mulf %434, %436 : vector<8x1xf32>
    %438 = math.log %437 : vector<8x1xf32>
    %439 = arith.addf %432, %438 : vector<8x1xf32>
    %cst_137 = arith.constant 4.000000e+00 : f32
    %440 = vector.broadcast %cst_137 : f32 to vector<8x1xf32>
    %441 = arith.addf %199, %440 : vector<8x1xf32>
    %cst_138 = arith.constant 5.000000e+00 : f32
    %442 = vector.broadcast %cst_138 : f32 to vector<8x1xf32>
    %443 = arith.addf %199, %442 : vector<8x1xf32>
    %444 = arith.mulf %441, %443 : vector<8x1xf32>
    %445 = math.log %444 : vector<8x1xf32>
    %446 = arith.addf %439, %445 : vector<8x1xf32>
    %cst_139 = arith.constant 6.000000e+00 : f32
    %447 = vector.broadcast %cst_139 : f32 to vector<8x1xf32>
    %448 = arith.addf %199, %447 : vector<8x1xf32>
    %449 = tpu.reciprocal %448 {approx = true} : vector<8x1xf32> -> vector<8x1xf32>
    %450 = arith.mulf %448, %449 : vector<8x1xf32>
    %cst_140 = arith.constant 2.000000e+00 : f32
    %451 = vector.broadcast %cst_140 : f32 to vector<8x1xf32>
    %452 = arith.subf %451, %450 : vector<8x1xf32>
    %453 = arith.mulf %449, %452 : vector<8x1xf32>
    %454 = arith.mulf %453, %453 : vector<8x1xf32>
    %cst_141 = arith.constant 5.000000e-01 : f32
    %455 = vector.broadcast %cst_141 : f32 to vector<8x1xf32>
    %456 = arith.subf %448, %455 : vector<8x1xf32>
    %457 = math.log %448 : vector<8x1xf32>
    %458 = arith.mulf %456, %457 : vector<8x1xf32>
    %459 = arith.subf %458, %448 : vector<8x1xf32>
    %cst_142 = arith.constant 0.918938517 : f32
    %460 = vector.broadcast %cst_142 : f32 to vector<8x1xf32>
    %461 = arith.addf %459, %460 : vector<8x1xf32>
    %cst_143 = arith.constant 7.93650805E-4 : f32
    %462 = vector.broadcast %cst_143 : f32 to vector<8x1xf32>
    %463 = arith.mulf %454, %462 : vector<8x1xf32>
    %cst_144 = arith.constant 0.00277777785 : f32
    %464 = vector.broadcast %cst_144 : f32 to vector<8x1xf32>
    %465 = arith.subf %464, %463 : vector<8x1xf32>
    %466 = arith.mulf %454, %465 : vector<8x1xf32>
    %cst_145 = arith.constant 0.0833333358 : f32
    %467 = vector.broadcast %cst_145 : f32 to vector<8x1xf32>
    %468 = arith.subf %467, %466 : vector<8x1xf32>
    %469 = arith.mulf %453, %468 : vector<8x1xf32>
    %470 = arith.addf %461, %469 : vector<8x1xf32>
    %471 = arith.subf %470, %446 : vector<8x1xf32>
    %472 = arith.subf %428, %471 : vector<8x1xf32>
    %473 = vector.broadcast %333 : vector<8x1xf32> to vector<8x16xf32>
    %474 = arith.subf %266, %473 : vector<8x16xf32>
    %cst_146 = arith.constant 1.000000e+00 : f32
    %475 = vector.broadcast %cst_146 : f32 to vector<8x16xf32>
    %476 = arith.subf %183, %475 : vector<8x16xf32>
    %477 = arith.mulf %474, %476 : vector<8x16xf32>
    %cst_147 = arith.constant dense<0.000000e+00> : vector<8xf32>
    %478 = vector.multi_reduction <add>, %477, %cst_147 [1] : vector<8x16xf32> to vector<8xf32>
    %479 = vector.shape_cast %478 : vector<8xf32> to vector<8x1xf32>
    %480 = arith.subf %472, %479 : vector<8x1xf32>
    %481 = tpu.reciprocal %178 {approx = true} : vector<8x1xf32> -> vector<8x1xf32>
    %482 = arith.mulf %178, %481 : vector<8x1xf32>
    %cst_148 = arith.constant 2.000000e+00 : f32
    %483 = vector.broadcast %cst_148 : f32 to vector<8x1xf32>
    %484 = arith.subf %483, %482 : vector<8x1xf32>
    %485 = arith.mulf %481, %484 : vector<8x1xf32>
    %486 = arith.mulf %480, %485 : vector<8x1xf32>
    %487 = arith.subf %383, %486 : vector<8x1xf32>
    %cst_149 = arith.constant 0.000000e+00 : f32
    %488 = vector.broadcast %cst_149 : f32 to vector<8x1xf32>
    %489 = arith.select %3, %487, %488 : vector<8x1xi1>, vector<8x1xf32>
    %cst_150 = arith.constant dense<0x7F800000> : vector<8xf32>
    %490 = vector.multi_reduction <minimumf>, %183, %cst_150 [1] : vector<8x16xf32> to vector<8xf32>
    %491 = vector.shape_cast %490 : vector<8xf32> to vector<8x1xf32>
    %cst_151 = arith.constant 3.40282347E+38 : f32
    %492 = vector.broadcast %cst_151 : f32 to vector<8x1xf32>
    %493 = arith.select %3, %491, %492 : vector<8x1xi1>, vector<8x1xf32>
    %c0_152 = arith.constant 0 : index
    %c0_153 = arith.constant 0 : index
    %494 = vector.load %arg4[%c0_152, %c0_153] : memref<8x12xf32, #tpu.memory_space<vmem>>, vector<8x1xf32>
    tpu.vector_store %arg4[%c0_152, %c0_153], %489 {strides = array<i32>} : memref<8x12xf32, #tpu.memory_space<vmem>>, vector<8x1xf32>,
    %c0_154 = arith.constant 0 : index
    %c1_155 = arith.constant 1 : index
    %495 = vector.load %arg4[%c0_154, %c1_155] : memref<8x12xf32, #tpu.memory_space<vmem>>, vector<8x1xf32>
    tpu.vector_store %arg4[%c0_154, %c1_155], %185 {strides = array<i32>} : memref<8x12xf32, #tpu.memory_space<vmem>>, vector<8x1xf32>,
    %c0_156 = arith.constant 0 : index
    %c2_157 = arith.constant 2 : index
    %496 = vector.load %arg4[%c0_156, %c2_157] : memref<8x12xf32, #tpu.memory_space<vmem>>, vector<8x1xf32>
    tpu.vector_store %arg4[%c0_156, %c2_157], %368 {strides = array<i32>} : memref<8x12xf32, #tpu.memory_space<vmem>>, vector<8x1xf32>,
    %c0_158 = arith.constant 0 : index
    %c3_159 = arith.constant 3 : index
    %497 = vector.load %arg4[%c0_158, %c3_159] : memref<8x12xf32, #tpu.memory_space<vmem>>, vector<8x1xf32>
    tpu.vector_store %arg4[%c0_158, %c3_159], %370 {strides = array<i32>} : memref<8x12xf32, #tpu.memory_space<vmem>>, vector<8x1xf32>,
    %c0_160 = arith.constant 0 : index
    %c4 = arith.constant 4 : index
    %498 = vector.load %arg4[%c0_160, %c4] : memref<8x12xf32, #tpu.memory_space<vmem>>, vector<8x1xf32>
    tpu.vector_store %arg4[%c0_160, %c4], %372 {strides = array<i32>} : memref<8x12xf32, #tpu.memory_space<vmem>>, vector<8x1xf32>,
    %c0_161 = arith.constant 0 : index
    %c5 = arith.constant 5 : index
    %499 = vector.load %arg4[%c0_161, %c5] : memref<8x12xf32, #tpu.memory_space<vmem>>, vector<8x1xf32>
    tpu.vector_store %arg4[%c0_161, %c5], %374 {strides = array<i32>} : memref<8x12xf32, #tpu.memory_space<vmem>>, vector<8x1xf32>,
    %c0_162 = arith.constant 0 : index
    %c6 = arith.constant 6 : index
    %500 = vector.load %arg4[%c0_162, %c6] : memref<8x12xf32, #tpu.memory_space<vmem>>, vector<8x1xf32>
    tpu.vector_store %arg4[%c0_162, %c6], %376 {strides = array<i32>} : memref<8x12xf32, #tpu.memory_space<vmem>>, vector<8x1xf32>,
    %c0_163 = arith.constant 0 : index
    %c7 = arith.constant 7 : index
    %501 = vector.load %arg4[%c0_163, %c7] : memref<8x12xf32, #tpu.memory_space<vmem>>, vector<8x1xf32>
    tpu.vector_store %arg4[%c0_163, %c7], %165 {strides = array<i32>} : memref<8x12xf32, #tpu.memory_space<vmem>>, vector<8x1xf32>,
    %c0_164 = arith.constant 0 : index
    %c8 = arith.constant 8 : index
    %502 = vector.load %arg4[%c0_164, %c8] : memref<8x12xf32, #tpu.memory_space<vmem>>, vector<8x1xf32>
    tpu.vector_store %arg4[%c0_164, %c8], %178 {strides = array<i32>} : memref<8x12xf32, #tpu.memory_space<vmem>>, vector<8x1xf32>,
    %c0_165 = arith.constant 0 : index
    %c9 = arith.constant 9 : index
    %503 = vector.load %arg4[%c0_165, %c9] : memref<8x12xf32, #tpu.memory_space<vmem>>, vector<8x1xf32>
    tpu.vector_store %arg4[%c0_165, %c9], %160 {strides = array<i32>} : memref<8x12xf32, #tpu.memory_space<vmem>>, vector<8x1xf32>,
    %c0_166 = arith.constant 0 : index
    %c10 = arith.constant 10 : index
    %504 = vector.load %arg4[%c0_166, %c10] : memref<8x12xf32, #tpu.memory_space<vmem>>, vector<8x1xf32>
    tpu.vector_store %arg4[%c0_166, %c10], %161 {strides = array<i32>} : memref<8x12xf32, #tpu.memory_space<vmem>>, vector<8x1xf32>,
    %c0_167 = arith.constant 0 : index
    %c11 = arith.constant 11 : index
    %505 = vector.load %arg4[%c0_167, %c11] : memref<8x12xf32, #tpu.memory_space<vmem>>, vector<8x1xf32>
    tpu.vector_store %arg4[%c0_167, %c11], %493 {strides = array<i32>} : memref<8x12xf32, #tpu.memory_space<vmem>>, vector<8x1xf32>,
    %c0_168 = arith.constant 0 : index
    %c0_169 = arith.constant 0 : index
    %506 = vector.load %arg5[%c0_168, %c0_169] : memref<8x16xf32, #tpu.memory_space<vmem>>, vector<8x16xf32>
    tpu.vector_store %arg5[%c0_168, %c0_169], %136 {strides = array<i32>} : memref<8x16xf32, #tpu.memory_space<vmem>>, vector<8x16xf32>,
    return
  }
  func.func @transform_0(%arg0: i32) -> (i32, i32) {
    %c0_i32 = arith.constant 0 : i32
    %c0_i32_0 = arith.constant 0 : i32
    return %arg0, %c0_i32 : i32, i32
  }
  func.func @transform_1(%arg0: i32) -> (i32, i32) {
    %c0_i32 = arith.constant 0 : i32
    %c0_i32_0 = arith.constant 0 : i32
    return %arg0, %c0_i32 : i32, i32
  }
  func.func @transform_2(%arg0: i32) -> (i32, i32, i32) {
    %c0_i32 = arith.constant 0 : i32
    %c0_i32_0 = arith.constant 0 : i32
    %c0_i32_1 = arith.constant 0 : i32
    return %arg0, %c0_i32, %c0_i32_0 : i32, i32, i32
  }
  func.func @transform_3(%arg0: i32) -> (i32, i32) {
    %c0_i32 = arith.constant 0 : i32
    %c0_i32_0 = arith.constant 0 : i32
    return %arg0, %c0_i32 : i32, i32
  }
  func.func @transform_4(%arg0: i32) -> (i32, i32) {
    %c0_i32 = arith.constant 0 : i32
    %c0_i32_0 = arith.constant 0 : i32
    return %arg0, %c0_i32 : i32, i32
  }
  func.func @transform_5(%arg0: i32) -> (i32, i32, i32) {
    %c0_i32 = arith.constant 0 : i32
    %c0_i32_0 = arith.constant 0 : i32
    %c0_i32_1 = arith.constant 0 : i32
    return %arg0, %c0_i32, %c0_i32_0 : i32, i32, i32
  }
}

</mosaic_0001>

<llo_original>
// kernel: rkl_dirichlet_mediator_loss.1
$region0: #{rkl_dirichlet_mediator_loss.1}
  #allocation0 [shape = 'u32[]', space=smem, size = 0x4, offset = 0x4, fixed_abs, tag = 'smem constant byte address 0x4 - core index']
  #allocation1 [shape = 'u32[144,128]{1,0:T(1,128)}', space=vmem, size = 0x12000, scoped, tag = 'internal scratch']
  %s0 = inlined_call_operand.vmem [shape: f32[8,1], index: 0, kind: input, shape index: {}]
  %s1 = inlined_call_operand.vmem [shape: f32[8,16], index: 1, kind: input, shape index: {}]
  %s2 = inlined_call_operand.hbm [shape: f32[8,4,16], index: 2, kind: input, shape index: {}]
  %s3 = inlined_call_operand.vmem [shape: f32[8,12], index: 3, kind: output, shape index: {0}]
  %s4 = inlined_call_operand.hbm [shape: f32[8,16], index: 4, kind: output, shape index: {1}]
  %s5 = inlined_call_operand.hbm [shape: f32[8,4,16], index: 5, kind: output, shape index: {2}]
  %6 = xla_tuple %s3, %s4, %s5
  %s7 = sld [smem:[#allocation0]]
  $region42: #{rkl_dirichlet_mediator_loss.1} parent=0
    _
  %s9 = ssub.s32 1, %s7
  %s10 = scalar_select 0, %s9, %s7
  $region1: #{rkl_dirichlet_mediator_loss.1} parent=0
    #allocation2 [shape = 'u8[16384]{0}', space=vmem, size = 0x4000, scoped, tag = 'input window, operand 2, single buffered']
    #allocation3 [shape = 's32[1]{0}', space=sflag, size = 0x4, scoped, tag = 'scoped memory for rkl_dirichlet_mediator_loss.1']
    #allocation4 [shape = 's32[1]{0}', space=sflag, size = 0x4, scoped, tag = 'scoped memory for rkl_dirichlet_mediator_loss.1']
    #allocation5 [shape = 'u8[4096]{0}', space=vmem, size = 0x1000, scoped, tag = 'output window, operand 1, single buffered']
    #allocation6 [shape = 'u8[16384]{0}', space=vmem, size = 0x4000, scoped, tag = 'output window, operand 2, single buffered']
    #allocation7 [shape = 's32[1]{0}', space=sflag, size = 0x4, scoped, tag = 'scoped memory for rkl_dirichlet_mediator_loss.1']
    %11 = vsyncpa [#allocation3], 0
    %12 = vsyncpa [#allocation4], 0
    %13 = vsyncpa [#allocation7], 0
    // Predicated region
    $region2: #{rkl_dirichlet_mediator_loss.1} parent=1 // pred_check
      _
    $region3: #{rkl_dirichlet_mediator_loss.1} parent=1 // pred_check_branch
      %15 = sbr.rel (0) target = $region5
    $region4: #{rkl_dirichlet_mediator_loss.1} parent=1 // pred_region
      _
    $region5: #{rkl_dirichlet_mediator_loss.1} parent=1 // pred_fallthru
      _
    // Predicated region
    $region6: #{rkl_dirichlet_mediator_loss.1} parent=1 // pred_check
      _
    $region7: #{rkl_dirichlet_mediator_loss.1} parent=1 // pred_check_branch
      %17 = sbr.rel (0) target = $region9
    $region8: #{rkl_dirichlet_mediator_loss.1} parent=1 // pred_region
      _
    $region9: #{rkl_dirichlet_mediator_loss.1} parent=1 // pred_fallthru
      _
    // Predicated region
    $region10: #{rkl_dirichlet_mediator_loss.1} parent=1 // pred_check
      _
    $region11: #{rkl_dirichlet_mediator_loss.1} parent=1 // pred_check_branch
      %19 = sbr.rel (0) target = $region13
    $region12: #{rkl_dirichlet_mediator_loss.1} parent=1 // pred_region
      %s21 = ssub.s32 512, 512
      %22 = vsyncadd [#allocation3], %s21
      %s23 = sshll.u32 [#allocation2], 4
      %s24 = int_to_ptr.vmem [resolvable:$true] %s23
      %29 = dma.hbm_to_vmem [thread:$0]  %s2, 512, %s24, [#allocation3], 64, 64, 4
    $region13: #{rkl_dirichlet_mediator_loss.1} parent=1 // pred_fallthru
      _
    // Predicated region
    $region14: #{rkl_dirichlet_mediator_loss.1} parent=1 // pred_check
      _
    $region15: #{rkl_dirichlet_mediator_loss.1} parent=1 // pred_check_branch
      %31 = sbr.rel (0) target = $region17
    $region16: #{rkl_dirichlet_mediator_loss.1} parent=1 // pred_region
      %32 = dma.done [#allocation3], 512
    $region17: #{rkl_dirichlet_mediator_loss.1} parent=1 // pred_fallthru
      _
    %v33 = vld [vmem:[%s1] sm:$0xff]
    %v34 = vld [vmem:[%s0] sm:$0xff]
    %vm35 = vcmp.gt.f32.partialorder %v34, 0.5
    %v36 = vld [vmem:[#allocation2] sm:$0x1]
    %v37 = vld [vmem:[#allocation2 + $0x4] sm:$0x1]
    %v38 = vld [vmem:[#allocation2 + $0x8] sm:$0x1]
    %v39 = vld [vmem:[#allocation2 + $0xc] sm:$0x1]
    %v40 = vld [vmem:[#allocation2 + $0x10] sm:$0x1]
    %v41 = vld [vmem:[#allocation2 + $0x14] sm:$0x1]
    %v42 = vld [vmem:[#allocation2 + $0x18] sm:$0x1]
    %v43 = vld [vmem:[#allocation2 + $0x1c] sm:$0x1]
    %v44 = vsel %vm35, 1, 0
    %45 = vset.pattern.permute.xlu0 0
    %46 = vperm.xlu0 %45, %v44
    %v47 = vpop.permute.xlu0 %46
    %vm48 = vcmp.eq.s32.totalorder %v47, 1
    %v57 = vrot.slane %v37, 7
    %vm58 = vcmask 1041409
    %v59 = vsel %vm58, %v57, %v36
    %v60 = vrot.slane %v38, 6
    %vm61 = vcmask 1042434
    %v62 = vsel %vm61, %v60, %v59
    %v63 = vrot.slane %v39, 5
    %vm64 = vcmask 1043459
    %v65 = vsel %vm64, %v63, %v62
    %v66 = vrot.slane %v40, 4
    %vm67 = vcmask 1044484
    %v68 = vsel %vm67, %v66, %v65
    %v69 = vrot.slane %v41, 3
    %vm70 = vcmask 1045509
    %v71 = vsel %vm70, %v69, %v68
    %v72 = vrot.slane %v42, 2
    %vm73 = vcmask 1046534
    %v74 = vsel %vm73, %v72, %v71
    %v75 = vrot.slane %v43, 1
    %vm76 = vcmask 1047559
    %v77 = vsel %vm76, %v75, %v74
    %v79 = vsel %vm48, %v77, 0.0625
    %v80 = vadd.f32 %v79, 6.25e-06
    %v81 = vlog2.pop %v80
    %v82 = vmul.f32 %v81, 0.6931472
    %vm83 = vcmask 130048
    %v84 = vsel %vm83, %v79, 0.0
    %85 = vadd.xlane.f32.xlu0 %v84
    %v86 = vpop.xlane.xlu0 %85
    %v87 = vrcp.pop %v86
    %v88 = vmul.f32 %v86, %v87
    %v89 = vsub.f32 2.0, %v88
    %v90 = vmul.f32 %v87, %v89
    %v91 = vmul.f32 %v79, %v90
    %v92 = vlog2.pop %v86
    %v93 = vmul.f32 %v92, 0.6931472
    %v94 = vsub.f32 %v82, %v93
    %v95 = vmul.f32 %v91, %v94
    %v96 = vsel %vm83, %v95, 0.0
    %97 = vadd.xlane.f32.xlu0 %v96
    %v98 = vpop.xlane.xlu0 %97
    %v99 = vsub.f32 0.0, %v98
    %v100 = vadd.f32 %v79, 0.0
    %v101 = vadd.f32 %v82, 0.0
    %v102 = vadd.f32 %v99, 0.0
    %v104 = vcombine.high %v82, %v82
    %v106 = vunpack.c.l.s4 1966171168
    %v107 = vunpack.c.0.s8 %v106
    %v108 = vlaneseq
    %v109 = vshrl.u32 %v108, 7
    %v110 = vsub.s32 %v107, %v109
    %v111 = vrot.slane %v82, %v110
    %v113 = vunpack.c.l.s4 1966171168
    %v114 = vunpack.c.0.s8 %v113
    %v115 = vlaneseq
    %v116 = vshrl.u32 %v115, 7
    %v117 = vsub.s32 %v114, %v116
    %v118 = vrot.slane %v104, %v117
    %v119 = vcombine.high %v111, %v111
    %v120 = vcombine.high %v118, %v118
    %v122 = vunpack.c.l.s4 1966171168
    %v123 = vunpack.c.0.s8 %v122
    %v124 = vlaneseq
    %v125 = vshrl.u32 %v124, 7
    %v126 = vsub.s32 %v123, %v125
    %v127 = vrot.slane %v111, %v126
    %v129 = vunpack.c.l.s4 1966171168
    %v130 = vunpack.c.0.s8 %v129
    %v131 = vlaneseq
    %v132 = vshrl.u32 %v131, 7
    %v133 = vsub.s32 %v130, %v132
    %v134 = vrot.slane %v118, %v133
    %v136 = vunpack.c.l.s4 1966171168
    %v137 = vunpack.c.0.s8 %v136
    %v138 = vlaneseq
    %v139 = vshrl.u32 %v138, 7
    %v140 = vsub.s32 %v137, %v139
    %v141 = vrot.slane %v119, %v140
    %v143 = vunpack.c.l.s4 1966171168
    %v144 = vunpack.c.0.s8 %v143
    %v145 = vlaneseq
    %v146 = vshrl.u32 %v145, 7
    %v147 = vsub.s32 %v144, %v146
    %v148 = vrot.slane %v120, %v147
    %v149 = vcombine.high %v127, %v127
    %v150 = vcombine.high %v134, %v134
    %v151 = vcombine.high %v141, %v141
    %v152 = vcombine.high %v148, %v148
    %vm161 = vcmask 122880
    %162 = vst.msk [vmem:[#allocation6] sm:$0x1] %vm161, %v127
    %163 = vst.msk [vmem:[#allocation6 + $0x4] sm:$0x1] %vm161, %v141
    %164 = vst.msk [vmem:[#allocation6 + $0x8] sm:$0x1] %vm161, %v149
    %165 = vst.msk [vmem:[#allocation6 + $0xc] sm:$0x1] %vm161, %v151
    %166 = vst.msk [vmem:[#allocation6 + $0x10] sm:$0x1] %vm161, %v134
    %167 = vst.msk [vmem:[#allocation6 + $0x14] sm:$0x1] %vm161, %v148
    %168 = vst.msk [vmem:[#allocation6 + $0x18] sm:$0x1] %vm161, %v150
    %169 = vst.msk [vmem:[#allocation6 + $0x1c] sm:$0x1] %vm161, %v152
    %v170 = vld [vmem:[#allocation2 + $0x1] sm:$0x1]
    %v171 = vld [vmem:[#allocation2 + $0x5] sm:$0x1]
    %v172 = vld [vmem:[#allocation2 + $0x9] sm:$0x1]
    %v173 = vld [vmem:[#allocation2 + $0xd] sm:$0x1]
    %v174 = vld [vmem:[#allocation2 + $0x11] sm:$0x1]
    %v175 = vld [vmem:[#allocation2 + $0x15] sm:$0x1]
    %v176 = vld [vmem:[#allocation2 + $0x19] sm:$0x1]
    %v177 = vld [vmem:[#allocation2 + $0x1d] sm:$0x1]
    %v186 = vrot.slane %v171, 7
    %v187 = vsel %vm58, %v186, %v170
    %v188 = vrot.slane %v172, 6
    %v189 = vsel %vm61, %v188, %v187
    %v190 = vrot.slane %v173, 5
    %v191 = vsel %vm64, %v190, %v189
    %v192 = vrot.slane %v174, 4
    %v193 = vsel %vm67, %v192, %v191
    %v194 = vrot.slane %v175, 3
    %v195 = vsel %vm70, %v194, %v193
    %v196 = vrot.slane %v176, 2
    %v197 = vsel %vm73, %v196, %v195
    %v198 = vrot.slane %v177, 1
    %v199 = vsel %vm76, %v198, %v197
    %v201 = vsel %vm48, %v199, 0.0625
    %v202 = vadd.f32 %v201, 6.25e-06
    %v203 = vlog2.pop %v202
    %v204 = vmul.f32 %v203, 0.6931472
    %v205 = vsel %vm83, %v201, 0.0
    %206 = vadd.xlane.f32.xlu0 %v205
    %v207 = vpop.xlane.xlu0 %206
    %v208 = vrcp.pop %v207
    %v209 = vmul.f32 %v207, %v208
    %v210 = vsub.f32 2.0, %v209
    %v211 = vmul.f32 %v208, %v210
    %v212 = vmul.f32 %v201, %v211
    %v213 = vlog2.pop %v207
    %v214 = vmul.f32 %v213, 0.6931472
    %v215 = vsub.f32 %v204, %v214
    %v216 = vmul.f32 %v212, %v215
    %v217 = vsel %vm83, %v216, 0.0
    %218 = vadd.xlane.f32.xlu0 %v217
    %v219 = vpop.xlane.xlu0 %218
    %v220 = vsub.f32 0.0, %v219
    %v221 = vadd.f32 %v100, %v201
    %v222 = vadd.f32 %v101, %v204
    %v223 = vadd.f32 %v102, %v220
    %v225 = vcombine.high %v204, %v204
    %v227 = vunpack.c.l.s4 1966171168
    %v228 = vunpack.c.0.s8 %v227
    %v229 = vlaneseq
    %v230 = vshrl.u32 %v229, 7
    %v231 = vsub.s32 %v228, %v230
    %v232 = vrot.slane %v204, %v231
    %v234 = vunpack.c.l.s4 1966171168
    %v235 = vunpack.c.0.s8 %v234
    %v236 = vlaneseq
    %v237 = vshrl.u32 %v236, 7
    %v238 = vsub.s32 %v235, %v237
    %v239 = vrot.slane %v225, %v238
    %v240 = vcombine.high %v232, %v232
    %v241 = vcombine.high %v239, %v239
    %v243 = vunpack.c.l.s4 1966171168
    %v244 = vunpack.c.0.s8 %v243
    %v245 = vlaneseq
    %v246 = vshrl.u32 %v245, 7
    %v247 = vsub.s32 %v244, %v246
    %v248 = vrot.slane %v232, %v247
    %v250 = vunpack.c.l.s4 1966171168
    %v251 = vunpack.c.0.s8 %v250
    %v252 = vlaneseq
    %v253 = vshrl.u32 %v252, 7
    %v254 = vsub.s32 %v251, %v253
    %v255 = vrot.slane %v239, %v254
    %v257 = vunpack.c.l.s4 1966171168
    %v258 = vunpack.c.0.s8 %v257
    %v259 = vlaneseq
    %v260 = vshrl.u32 %v259, 7
    %v261 = vsub.s32 %v258, %v260
    %v262 = vrot.slane %v240, %v261
    %v264 = vunpack.c.l.s4 1966171168
    %v265 = vunpack.c.0.s8 %v264
    %v266 = vlaneseq
    %v267 = vshrl.u32 %v266, 7
    %v268 = vsub.s32 %v265, %v267
    %v269 = vrot.slane %v241, %v268
    %v270 = vcombine.high %v248, %v248
    %v271 = vcombine.high %v255, %v255
    %v272 = vcombine.high %v262, %v262
    %v273 = vcombine.high %v269, %v269
    %282 = vst.msk [vmem:[#allocation6 + $0x1] sm:$0x1] %vm161, %v248
    %283 = vst.msk [vmem:[#allocation6 + $0x5] sm:$0x1] %vm161, %v262
    %284 = vst.msk [vmem:[#allocation6 + $0x9] sm:$0x1] %vm161, %v270
    %285 = vst.msk [vmem:[#allocation6 + $0xd] sm:$0x1] %vm161, %v272
    %286 = vst.msk [vmem:[#allocation6 + $0x11] sm:$0x1] %vm161, %v255
    %287 = vst.msk [vmem:[#allocation6 + $0x15] sm:$0x1] %vm161, %v269
    %288 = vst.msk [vmem:[#allocation6 + $0x19] sm:$0x1] %vm161, %v271
    %289 = vst.msk [vmem:[#allocation6 + $0x1d] sm:$0x1] %vm161, %v273
    %v290 = vld [vmem:[#allocation2 + $0x2] sm:$0x1]
    %v291 = vld [vmem:[#allocation2 + $0x6] sm:$0x1]
    %v292 = vld [vmem:[#allocation2 + $0xa] sm:$0x1]
    %v293 = vld [vmem:[#allocation2 + $0xe] sm:$0x1]
    %v294 = vld [vmem:[#allocation2 + $0x12] sm:$0x1]
    %v295 = vld [vmem:[#allocation2 + $0x16] sm:$0x1]
    %v296 = vld [vmem:[#allocation2 + $0x1a] sm:$0x1]
    %v297 = vld [vmem:[#allocation2 + $0x1e] sm:$0x1]
    %v306 = vrot.slane %v291, 7
    %v307 = vsel %vm58, %v306, %v290
    %v308 = vrot.slane %v292, 6
    %v309 = vsel %vm61, %v308, %v307
    %v310 = vrot.slane %v293, 5
    %v311 = vsel %vm64, %v310, %v309
    %v312 = vrot.slane %v294, 4
    %v313 = vsel %vm67, %v312, %v311
    %v314 = vrot.slane %v295, 3
    %v315 = vsel %vm70, %v314, %v313
    %v316 = vrot.slane %v296, 2
    %v317 = vsel %vm73, %v316, %v315
    %v318 = vrot.slane %v297, 1
    %v319 = vsel %vm76, %v318, %v317
    %v321 = vsel %vm48, %v319, 0.0625
    %v322 = vadd.f32 %v321, 6.25e-06
    %v323 = vlog2.pop %v322
    %v324 = vmul.f32 %v323, 0.6931472
    %v325 = vsel %vm83, %v321, 0.0
    %326 = vadd.xlane.f32.xlu0 %v325
    %v327 = vpop.xlane.xlu0 %326
    %v328 = vrcp.pop %v327
    %v329 = vmul.f32 %v327, %v328
    %v330 = vsub.f32 2.0, %v329
    %v331 = vmul.f32 %v328, %v330
    %v332 = vmul.f32 %v321, %v331
    %v333 = vlog2.pop %v327
    %v334 = vmul.f32 %v333, 0.6931472
    %v335 = vsub.f32 %v324, %v334
    %v336 = vmul.f32 %v332, %v335
    %v337 = vsel %vm83, %v336, 0.0
    %338 = vadd.xlane.f32.xlu0 %v337
    %v339 = vpop.xlane.xlu0 %338
    %v340 = vsub.f32 0.0, %v339
    %v341 = vadd.f32 %v221, %v321
    %v342 = vadd.f32 %v222, %v324
    %v343 = vadd.f32 %v223, %v340
    %v345 = vcombine.high %v324, %v324
    %v347 = vunpack.c.l.s4 1966171168
    %v348 = vunpack.c.0.s8 %v347
    %v349 = vlaneseq
    %v350 = vshrl.u32 %v349, 7
    %v351 = vsub.s32 %v348, %v350
    %v352 = vrot.slane %v324, %v351
    %v354 = vunpack.c.l.s4 1966171168
    %v355 = vunpack.c.0.s8 %v354
    %v356 = vlaneseq
    %v357 = vshrl.u32 %v356, 7
    %v358 = vsub.s32 %v355, %v357
    %v359 = vrot.slane %v345, %v358
    %v360 = vcombine.high %v352, %v352
    %v361 = vcombine.high %v359, %v359
    %v363 = vunpack.c.l.s4 1966171168
    %v364 = vunpack.c.0.s8 %v363
    %v365 = vlaneseq
    %v366 = vshrl.u32 %v365, 7
    %v367 = vsub.s32 %v364, %v366
    %v368 = vrot.slane %v352, %v367
    %v370 = vunpack.c.l.s4 1966171168
    %v371 = vunpack.c.0.s8 %v370
    %v372 = vlaneseq
    %v373 = vshrl.u32 %v372, 7
    %v374 = vsub.s32 %v371, %v373
    %v375 = vrot.slane %v359, %v374
    %v377 = vunpack.c.l.s4 1966171168
    %v378 = vunpack.c.0.s8 %v377
    %v379 = vlaneseq
    %v380 = vshrl.u32 %v379, 7
    %v381 = vsub.s32 %v378, %v380
    %v382 = vrot.slane %v360, %v381
    %v384 = vunpack.c.l.s4 1966171168
    %v385 = vunpack.c.0.s8 %v384
    %v386 = vlaneseq
    %v387 = vshrl.u32 %v386, 7
    %v388 = vsub.s32 %v385, %v387
    %v389 = vrot.slane %v361, %v388
    %v390 = vcombine.high %v368, %v368
    %v391 = vcombine.high %v375, %v375
    %v392 = vcombine.high %v382, %v382
    %v393 = vcombine.high %v389, %v389
    %402 = vst.msk [vmem:[#allocation6 + $0x2] sm:$0x1] %vm161, %v368
    %403 = vst.msk [vmem:[#allocation6 + $0x6] sm:$0x1] %vm161, %v382
    %404 = vst.msk [vmem:[#allocation6 + $0xa] sm:$0x1] %vm161, %v390
    %405 = vst.msk [vmem:[#allocation6 + $0xe] sm:$0x1] %vm161, %v392
    %406 = vst.msk [vmem:[#allocation6 + $0x12] sm:$0x1] %vm161, %v375
    %407 = vst.msk [vmem:[#allocation6 + $0x16] sm:$0x1] %vm161, %v389
    %408 = vst.msk [vmem:[#allocation6 + $0x1a] sm:$0x1] %vm161, %v391
    %409 = vst.msk [vmem:[#allocation6 + $0x1e] sm:$0x1] %vm161, %v393
    %v410 = vld [vmem:[#allocation2 + $0x3] sm:$0x1]
    %v411 = vld [vmem:[#allocation2 + $0x7] sm:$0x1]
    %v412 = vld [vmem:[#allocation2 + $0xb] sm:$0x1]
    %v413 = vld [vmem:[#allocation2 + $0xf] sm:$0x1]
    %v414 = vld [vmem:[#allocation2 + $0x13] sm:$0x1]
    %v415 = vld [vmem:[#allocation2 + $0x17] sm:$0x1]
    %v416 = vld [vmem:[#allocation2 + $0x1b] sm:$0x1]
    %v417 = vld [vmem:[#allocation2 + $0x1f] sm:$0x1]
    %v426 = vrot.slane %v411, 7
    %v427 = vsel %vm58, %v426, %v410
    %v428 = vrot.slane %v412, 6
    %v429 = vsel %vm61, %v428, %v427
    %v430 = vrot.slane %v413, 5
    %v431 = vsel %vm64, %v430, %v429
    %v432 = vrot.slane %v414, 4
    %v433 = vsel %vm67, %v432, %v431
    %v434 = vrot.slane %v415, 3
    %v435 = vsel %vm70, %v434, %v433
    %v436 = vrot.slane %v416, 2
    %v437 = vsel %vm73, %v436, %v435
    %v438 = vrot.slane %v417, 1
    %v439 = vsel %vm76, %v438, %v437
    %v441 = vsel %vm48, %v439, 0.0625
    %v442 = vadd.f32 %v441, 6.25e-06
    %v443 = vlog2.pop %v442
    %v444 = vmul.f32 %v443, 0.6931472
    %v445 = vsel %vm83, %v441, 0.0
    %446 = vadd.xlane.f32.xlu0 %v445
    %v447 = vpop.xlane.xlu0 %446
    %v448 = vrcp.pop %v447
    %v449 = vmul.f32 %v447, %v448
    %v450 = vsub.f32 2.0, %v449
    %v451 = vmul.f32 %v448, %v450
    %v452 = vmul.f32 %v441, %v451
    %v453 = vlog2.pop %v447
    %v454 = vmul.f32 %v453, 0.6931472
    %v455 = vsub.f32 %v444, %v454
    %v456 = vmul.f32 %v452, %v455
    %v457 = vsel %vm83, %v456, 0.0
    %458 = vadd.xlane.f32.xlu0 %v457
    %v459 = vpop.xlane.xlu0 %458
    %v460 = vsub.f32 0.0, %v459
    %v461 = vadd.f32 %v341, %v441
    %v462 = vadd.f32 %v342, %v444
    %v463 = vadd.f32 %v343, %v460
    %v465 = vcombine.high %v444, %v444
    %v467 = vunpack.c.l.s4 1966171168
    %v468 = vunpack.c.0.s8 %v467
    %v469 = vlaneseq
    %v470 = vshrl.u32 %v469, 7
    %v471 = vsub.s32 %v468, %v470
    %v472 = vrot.slane %v444, %v471
    %v474 = vunpack.c.l.s4 1966171168
    %v475 = vunpack.c.0.s8 %v474
    %v476 = vlaneseq
    %v477 = vshrl.u32 %v476, 7
    %v478 = vsub.s32 %v475, %v477
    %v479 = vrot.slane %v465, %v478
    %v480 = vcombine.high %v472, %v472
    %v481 = vcombine.high %v479, %v479
    %v483 = vunpack.c.l.s4 1966171168
    %v484 = vunpack.c.0.s8 %v483
    %v485 = vlaneseq
    %v486 = vshrl.u32 %v485, 7
    %v487 = vsub.s32 %v484, %v486
    %v488 = vrot.slane %v472, %v487
    %v490 = vunpack.c.l.s4 1966171168
    %v491 = vunpack.c.0.s8 %v490
    %v492 = vlaneseq
    %v493 = vshrl.u32 %v492, 7
    %v494 = vsub.s32 %v491, %v493
    %v495 = vrot.slane %v479, %v494
    %v497 = vunpack.c.l.s4 1966171168
    %v498 = vunpack.c.0.s8 %v497
    %v499 = vlaneseq
    %v500 = vshrl.u32 %v499, 7
    %v501 = vsub.s32 %v498, %v500
    %v502 = vrot.slane %v480, %v501
    %v504 = vunpack.c.l.s4 1966171168
    %v505 = vunpack.c.0.s8 %v504
    %v506 = vlaneseq
    %v507 = vshrl.u32 %v506, 7
    %v508 = vsub.s32 %v505, %v507
    %v509 = vrot.slane %v481, %v508
    %v510 = vcombine.high %v488, %v488
    %v511 = vcombine.high %v495, %v495
    %v512 = vcombine.high %v502, %v502
    %v513 = vcombine.high %v509, %v509
    %522 = vst.msk [vmem:[#allocation6 + $0x3] sm:$0x1] %vm161, %v488
    %523 = vst.msk [vmem:[#allocation6 + $0x7] sm:$0x1] %vm161, %v502
    %524 = vst.msk [vmem:[#allocation6 + $0xb] sm:$0x1] %vm161, %v510
    %525 = vst.msk [vmem:[#allocation6 + $0xf] sm:$0x1] %vm161, %v512
    %526 = vst.msk [vmem:[#allocation6 + $0x13] sm:$0x1] %vm161, %v495
    %527 = vst.msk [vmem:[#allocation6 + $0x17] sm:$0x1] %vm161, %v509
    %528 = vst.msk [vmem:[#allocation6 + $0x1b] sm:$0x1] %vm161, %v511
    %529 = vst.msk [vmem:[#allocation6 + $0x1f] sm:$0x1] %vm161, %v513
    %v530 = vmul.f32 %v461, 0.25
    %v531 = vmul.f32 %v462, 0.25
    %v532 = vmul.f32 %v463, 0.25
    %v533 = vadd.f32 %v530, 1e-30
    %v534 = vlog2.pop %v533
    %v535 = vmul.f32 %v534, 0.6931472
    %v536 = vsel %vm83, %v530, 0.0
    %537 = vadd.xlane.f32.xlu0 %v536
    %v538 = vpop.xlane.xlu0 %537
    %v539 = vrcp.pop %v538
    %v540 = vmul.f32 %v538, %v539
    %v541 = vsub.f32 2.0, %v540
    %v542 = vmul.f32 %v539, %v541
    %v543 = vmul.f32 %v530, %v542
    %v544 = vlog2.pop %v538
    %v545 = vmul.f32 %v544, 0.6931472
    %v546 = vsub.f32 %v535, %v545
    %v547 = vmul.f32 %v543, %v546
    %v548 = vsel %vm83, %v547, 0.0
    %549 = vadd.xlane.f32.xlu0 %v548
    %v550 = vpop.xlane.xlu0 %549
    %v551 = vsub.f32 0.0, %v550
    %v552 = vsub.f32 %v551, %v532
    %v553 = vsub.f32 %v535, %v531
    %v554 = vmul.f32 %v530, %v553
    %v555 = vsel %vm83, %v554, 0.0
    %556 = vadd.xlane.f32.xlu0 %v555
    %v557 = vpop.xlane.xlu0 %556
    %v558 = vmul.f32 %v557, 2.0
    %v559 = vadd.f32 %v558, 1.1920929e-07
    %v560 = vrcp.pop %v559
    %v561 = vmul.f32 %v559, %v560
    %v562 = vsub.f32 2.0, %v561
    %v563 = vmul.f32 %v560, %v562
    %v564 = vmul.f32 %v563, 15.0
    %v565 = vadd.f32 %v564, 16.0
    %v566 = vmul.f32 %v33, 1.442695
    %v567 = vpow.pop %v566
    %v568 = vadd.f32 %v567, 1.0
    %v569 = vmin.f32 %v568, 2.1267647e+37
    %v570 = vsel %vm83, %v569, 0.0
    %571 = vadd.xlane.f32.xlu0 %v570
    %v572 = vpop.xlane.xlu0 %571
    %v573 = vrcp.pop %v572
    %v574 = vmul.f32 %v572, %v573
    %v575 = vsub.f32 2.0, %v574
    %v576 = vmul.f32 %v573, %v575
    %v577 = vmul.f32 %v569, %v576
    %v578 = vadd.f32 %v577, 1.1920929e-07
    %v579 = vlog2.pop %v578
    %v580 = vmul.f32 %v579, 0.6931472
    %v581 = vadd.f32 %v569, 1.1920929e-07
    %v582 = vadd.f32 %v572, 1.1920929e-07
    %v583 = vrcp.pop %v581
    %v584 = vmul.f32 %v581, %v583
    %v585 = vsub.f32 2.0, %v584
    %v586 = vmul.f32 %v583, %v585
    %v587 = vadd.f32 %v581, 1.0
    %v588 = vrcp.pop %v587
    %v589 = vmul.f32 %v587, %v588
    %v590 = vsub.f32 2.0, %v589
    %v591 = vmul.f32 %v588, %v590
    %v592 = vadd.f32 %v586, %v591
    %v593 = vadd.f32 %v581, 2.0
    %v594 = vrcp.pop %v593
    %v595 = vmul.f32 %v593, %v594
    %v596 = vsub.f32 2.0, %v595
    %v597 = vmul.f32 %v594, %v596
    %v598 = vadd.f32 %v592, %v597
    %v599 = vadd.f32 %v581, 3.0
    %v600 = vrcp.pop %v599
    %v601 = vmul.f32 %v599, %v600
    %v602 = vsub.f32 2.0, %v601
    %v603 = vmul.f32 %v600, %v602
    %v604 = vadd.f32 %v598, %v603
    %v605 = vadd.f32 %v581, 4.0
    %v606 = vrcp.pop %v605
    %v607 = vmul.f32 %v605, %v606
    %v608 = vsub.f32 2.0, %v607
    %v609 = vmul.f32 %v606, %v608
    %v610 = vadd.f32 %v604, %v609
    %v611 = vadd.f32 %v581, 5.0
    %v612 = vrcp.pop %v611
    %v613 = vmul.f32 %v611, %v612
    %v614 = vsub.f32 2.0, %v613
    %v615 = vmul.f32 %v612, %v614
    %v616 = vadd.f32 %v610, %v615
    %v617 = vadd.f32 %v581, 6.0
    %v618 = vrcp.pop %v617
    %v619 = vmul.f32 %v617, %v618
    %v620 = vsub.f32 2.0, %v619
    %v621 = vmul.f32 %v618, %v620
    %v622 = vmul.f32 %v621, %v621
    %v623 = vlog2.pop %v617
    %v624 = vmul.f32 %v623, 0.6931472
    %v625 = vmul.f32 %v621, 0.5
    %v626 = vsub.f32 %v624, %v625
    %v627 = vmul.f32 %v622, 0.003968254
    %v628 = vsub.f32 0.008333334, %v627
    %v629 = vmul.f32 %v622, %v628
    %v630 = vsub.f32 0.083333336, %v629
    %v631 = vmul.f32 %v622, %v630
    %v632 = vsub.f32 %v626, %v631
    %v633 = vsub.f32 %v632, %v616
    %v634 = vrcp.pop %v582
    %v635 = vmul.f32 %v582, %v634
    %v636 = vsub.f32 2.0, %v635
    %v637 = vmul.f32 %v634, %v636
    %v638 = vadd.f32 %v582, 1.0
    %v639 = vrcp.pop %v638
    %v640 = vmul.f32 %v638, %v639
    %v641 = vsub.f32 2.0, %v640
    %v642 = vmul.f32 %v639, %v641
    %v643 = vadd.f32 %v637, %v642
    %v644 = vadd.f32 %v582, 2.0
    %v645 = vrcp.pop %v644
    %v646 = vmul.f32 %v644, %v645
    %v647 = vsub.f32 2.0, %v646
    %v648 = vmul.f32 %v645, %v647
    %v649 = vadd.f32 %v643, %v648
    %v650 = vadd.f32 %v582, 3.0
    %v651 = vrcp.pop %v650
    %v652 = vmul.f32 %v650, %v651
    %v653 = vsub.f32 2.0, %v652
    %v654 = vmul.f32 %v651, %v653
    %v655 = vadd.f32 %v649, %v654
    %v656 = vadd.f32 %v582, 4.0
    %v657 = vrcp.pop %v656
    %v658 = vmul.f32 %v656, %v657
    %v659 = vsub.f32 2.0, %v658
    %v660 = vmul.f32 %v657, %v659
    %v661 = vadd.f32 %v655, %v660
    %v662 = vadd.f32 %v582, 5.0
    %v663 = vrcp.pop %v662
    %v664 = vmul.f32 %v662, %v663
    %v665 = vsub.f32 2.0, %v664
    %v666 = vmul.f32 %v663, %v665
    %v667 = vadd.f32 %v661, %v666
    %v668 = vadd.f32 %v582, 6.0
    %v669 = vrcp.pop %v668
    %v670 = vmul.f32 %v668, %v669
    %v671 = vsub.f32 2.0, %v670
    %v672 = vmul.f32 %v669, %v671
    %v673 = vmul.f32 %v672, %v672
    %v674 = vlog2.pop %v668
    %v675 = vmul.f32 %v674, 0.6931472
    %v676 = vmul.f32 %v672, 0.5
    %v677 = vsub.f32 %v675, %v676
    %v678 = vmul.f32 %v673, 0.003968254
    %v679 = vsub.f32 0.008333334, %v678
    %v680 = vmul.f32 %v673, %v679
    %v681 = vsub.f32 0.083333336, %v680
    %v682 = vmul.f32 %v673, %v681
    %v683 = vsub.f32 %v677, %v682
    %v684 = vsub.f32 %v683, %v667
    %v685 = vadd.f32 %v633, %v586
    %v686 = vadd.f32 %v684, %v637
    %v687 = vmul.f32 %v577, %v580
    %v688 = vsel %vm83, %v687, 0.0
    %689 = vadd.xlane.f32.xlu0 %v688
    %v690 = vpop.xlane.xlu0 %689
    %v691 = vsub.f32 0.0, %v690
    %v692 = vsub.f32 %v685, %v686
    %v693 = vmul.f32 %v577, %v692
    %v694 = vsel %vm83, %v693, 0.0
    %695 = vadd.xlane.f32.xlu0 %v694
    %v696 = vpop.xlane.xlu0 %695
    %v697 = vsub.f32 0.0, %v696
    %v698 = vsub.f32 %v691, %v697
    %v699 = vmul.f32 %v576, 15.0
    %v700 = vsub.f32 %v580, %v633
    %v701 = vadd.f32 %v700, %v684
    %v702 = vmul.f32 %v577, %v701
    %v703 = vsel %vm83, %v702, 0.0
    %704 = vadd.xlane.f32.xlu0 %v703
    %v705 = vpop.xlane.xlu0 %704
    %v706 = vmax.f32 %v691, 0.0
    %v707 = vmax.f32 %v697, 0.0
    %v708 = vmax.f32 %v698, 0.0
    %v709 = vmax.f32 %v699, 0.0
    %v710 = vmax.f32 %v705, 0.0
    %v711 = vsub.f32 %v633, %v684
    %v712 = vmul.f32 %v530, %v711
    %v713 = vsel %vm83, %v712, 0.0
    %714 = vadd.xlane.f32.xlu0 %v713
    %v715 = vpop.xlane.xlu0 %714
    %v716 = vsub.f32 0.0, %v715
    %v717 = vmul.f32 %v581, %v587
    %v718 = vlog2.pop %v717
    %v719 = vmul.f32 %v718, 0.6931472
    %v720 = vmul.f32 %v593, %v599
    %v721 = vlog2.pop %v720
    %v722 = vmul.f32 %v721, 0.6931472
    %v723 = vadd.f32 %v719, %v722
    %v724 = vmul.f32 %v605, %v611
    %v725 = vlog2.pop %v724
    %v726 = vmul.f32 %v725, 0.6931472
    %v727 = vadd.f32 %v723, %v726
    %v728 = vsub.f32 %v617, 0.5
    %v729 = vmul.f32 %v728, %v624
    %v730 = vsub.f32 %v729, %v617
    %v731 = vadd.f32 %v730, 0.9189385
    %v732 = vmul.f32 %v622, 0.0007936508
    %v733 = vsub.f32 0.0027777778, %v732
    %v734 = vmul.f32 %v622, %v733
    %v735 = vsub.f32 0.083333336, %v734
    %v736 = vmul.f32 %v621, %v735
    %v737 = vadd.f32 %v731, %v736
    %v738 = vsub.f32 %v737, %v727
    %v739 = vsel %vm83, %v738, 0.0
    %740 = vadd.xlane.f32.xlu0 %v739
    %v741 = vpop.xlane.xlu0 %740
    %v742 = vmul.f32 %v582, %v638
    %v743 = vlog2.pop %v742
    %v744 = vmul.f32 %v743, 0.6931472
    %v745 = vmul.f32 %v644, %v650
    %v746 = vlog2.pop %v745
    %v747 = vmul.f32 %v746, 0.6931472
    %v748 = vadd.f32 %v744, %v747
    %v749 = vmul.f32 %v656, %v662
    %v750 = vlog2.pop %v749
    %v751 = vmul.f32 %v750, 0.6931472
    %v752 = vadd.f32 %v748, %v751
    %v753 = vsub.f32 %v668, 0.5
    %v754 = vmul.f32 %v753, %v675
    %v755 = vsub.f32 %v754, %v668
    %v756 = vadd.f32 %v755, 0.9189385
    %v757 = vmul.f32 %v673, 0.0007936508
    %v758 = vsub.f32 0.0027777778, %v757
    %v759 = vmul.f32 %v673, %v758
    %v760 = vsub.f32 0.083333336, %v759
    %v761 = vmul.f32 %v672, %v760
    %v762 = vadd.f32 %v756, %v761
    %v763 = vsub.f32 %v762, %v752
    %v764 = vsub.f32 %v741, %v763
    %v765 = vsub.f32 %v569, 1.0
    %v766 = vmul.f32 %v711, %v765
    %v767 = vsel %vm83, %v766, 0.0
    %768 = vadd.xlane.f32.xlu0 %v767
    %v769 = vpop.xlane.xlu0 %768
    %v770 = vsub.f32 %v764, %v769
    %v771 = vrcp.pop %v565
    %v772 = vmul.f32 %v565, %v771
    %v773 = vsub.f32 2.0, %v772
    %v774 = vmul.f32 %v771, %v773
    %v775 = vmul.f32 %v770, %v774
    %v776 = vsub.f32 %v716, %v775
    %v777 = vsel %vm35, %v776, 0.0
    %v778 = vsel %vm83, %v569, inf
    %779 = vmin.xlane.f32.xlu0 %v778
    %v780 = vpop.xlane.xlu0 %779
    %v781 = vsel %vm35, %v780, 3.4028235e+38
    %vm782 = vcmask 7168
    %783 = vst.msk [vmem:[%s3] sm:$0xff] %vm782, %v777
    %vm784 = vcmask 15368
    %785 = vst.msk [vmem:[%s3] sm:$0xff] %vm784, %v572
    %vm786 = vcmask 23568
    %787 = vst.msk [vmem:[%s3] sm:$0xff] %vm786, %v706
    %vm788 = vcmask 31768
    %789 = vst.msk [vmem:[%s3] sm:$0xff] %vm788, %v707
    %vm790 = vcmask 39968
    %791 = vst.msk [vmem:[%s3] sm:$0xff] %vm790, %v708
    %vm792 = vcmask 48168
    %793 = vst.msk [vmem:[%s3] sm:$0xff] %vm792, %v709
    %vm794 = vcmask 56368
    %795 = vst.msk [vmem:[%s3] sm:$0xff] %vm794, %v710
    %vm796 = vcmask 64568
    %797 = vst.msk [vmem:[%s3] sm:$0xff] %vm796, %v557
    %vm798 = vcmask 72768
    %799 = vst.msk [vmem:[%s3] sm:$0xff] %vm798, %v565
    %vm800 = vcmask 80968
    %801 = vst.msk [vmem:[%s3] sm:$0xff] %vm800, %v551
    %vm802 = vcmask 89168
    %803 = vst.msk [vmem:[%s3] sm:$0xff] %vm802, %v552
    %805 = vrot.lane.b32.xlu0 %v781, 11
    %v806 = vpop.permute.xlu0 %805
    %vm808 = vcmask 97368
    %809 = vst.msk [vmem:[%s3] sm:$0xff] %vm808, %v806
    %810 = vst.msk [vmem:[#allocation5] sm:$0xff] %vm83, %v530
    // Predicated region
    $region18: #{rkl_dirichlet_mediator_loss.1} parent=1 // pred_check
      _
    $region19: #{rkl_dirichlet_mediator_loss.1} parent=1 // pred_check_branch
      %812 = sbr.rel (0) target = $region21
    $region20: #{rkl_dirichlet_mediator_loss.1} parent=1 // pred_region
      _
    $region21: #{rkl_dirichlet_mediator_loss.1} parent=1 // pred_fallthru
      _
    // Predicated region
    $region22: #{rkl_dirichlet_mediator_loss.1} parent=1 // pred_check
      _
    $region23: #{rkl_dirichlet_mediator_loss.1} parent=1 // pred_check_branch
      %814 = sbr.rel (0) target = $region25
    $region24: #{rkl_dirichlet_mediator_loss.1} parent=1 // pred_region
      %s816 = ssub.s32 128, 128
      %817 = vsyncadd [#allocation4], %s816
      %s819 = sshll.u32 [#allocation5], 4
      %s820 = int_to_ptr.vmem [resolvable:$true] %s819
      %822 = dma.vmem_to_hbm [thread:$0]  %s820, 128, %s4, [#allocation4]
    $region25: #{rkl_dirichlet_mediator_loss.1} parent=1 // pred_fallthru
      _
    // Predicated region
    $region26: #{rkl_dirichlet_mediator_loss.1} parent=1 // pred_check
      _
    $region27: #{rkl_dirichlet_mediator_loss.1} parent=1 // pred_check_branch
      %824 = sbr.rel (0) target = $region29
    $region28: #{rkl_dirichlet_mediator_loss.1} parent=1 // pred_region
      %s826 = ssub.s32 512, 512
      %827 = vsyncadd [#allocation7], %s826
      %s828 = sshll.u32 [#allocation6], 4
      %s829 = int_to_ptr.vmem [resolvable:$true] %s828
      %834 = dma.vmem_to_hbm [thread:$0]  %s829, 512, %s5, [#allocation7], 64, 64, 4
    $region29: #{rkl_dirichlet_mediator_loss.1} parent=1 // pred_fallthru
      _
    // Predicated region
    $region30: #{rkl_dirichlet_mediator_loss.1} parent=1 // pred_check
      _
    $region31: #{rkl_dirichlet_mediator_loss.1} parent=1 // pred_check_branch
      %836 = sbr.rel (0) target = $region33
    $region32: #{rkl_dirichlet_mediator_loss.1} parent=1 // pred_region
      _
    $region33: #{rkl_dirichlet_mediator_loss.1} parent=1 // pred_fallthru
      _
    // Predicated region
    $region34: #{rkl_dirichlet_mediator_loss.1} parent=1 // pred_check
      _
    $region35: #{rkl_dirichlet_mediator_loss.1} parent=1 // pred_check_branch
      %838 = sbr.rel (0) target = $region37
    $region36: #{rkl_dirichlet_mediator_loss.1} parent=1 // pred_region
      %839 = dma.done [#allocation4], 128
    $region37: #{rkl_dirichlet_mediator_loss.1} parent=1 // pred_fallthru
      _
    // Predicated region
    $region38: #{rkl_dirichlet_mediator_loss.1} parent=1 // pred_check
      _
    $region39: #{rkl_dirichlet_mediator_loss.1} parent=1 // pred_check_branch
      %841 = sbr.rel (0) target = $region41
    $region40: #{rkl_dirichlet_mediator_loss.1} parent=1 // pred_region
      %842 = dma.done [#allocation7], 512
    $region41: #{rkl_dirichlet_mediator_loss.1} parent=1 // pred_fallthru
      _
    %843 = vsyncpa [#allocation3], 1
    %844 = vsyncpa [#allocation4], 1
    %845 = vsyncpa [#allocation7], 1

</llo_original>
